<compile_context>
chip_gen: v5e
topology: v5e:2x2
jax: 0.10.0
libtpu: 0.0.40
codegen_flags: <defaults>
</compile_context>

<pallas_src>
import functools

import jax
import jax.numpy as jnp
from jax.experimental import pallas as pl
from jax.experimental.pallas import tpu as pltpu

_BN_EPS = 1e-5
_GEMM_VMEM_LIMIT_BYTES = 64 * 1024 * 1024


def _round_up(x, m):
    return (x + m - 1) // m * m


def _largest_divisor_tile(dim, cap, mult):
    """Largest t <= cap with t % mult == 0 and dim % t == 0 (None if there is none)."""
    t = min(cap, dim)
    t -= t % mult
    while t >= mult:
        if dim % t == 0:
            return t
        t -= mult
    return None


def _pick_row_tile(m, c, itemsize=2, target_bytes=4 << 20, cap=4096):
    """Row tile for [M, C] elementwise kernels: big blocks (~4 MiB/operand), divisor of M."""
    rows = max(8, min(cap, target_bytes // max(c * itemsize, 1)))
    if m <= rows:
        return m
    rows -= rows % 8
    return _largest_divisor_tile(m, rows, 8)   # None -> caller falls back to padding


# ---------------------------------------------------------------------------
# GEMM kernel with fused consumer-side BN (A path) and fused BN-stats epilogue
# ---------------------------------------------------------------------------

def _gemm_kernel(*refs, fuse_bn, stats, relu, mask_rows, tm):
    if fuse_bn:
        a_ref, sc_ref, sh_ref, b_ref = refs[:4]
        rest = refs[4:]
    else:
        a_ref, b_ref = refs[:2]
        rest = refs[2:]
    if stats:
        o_ref, sum_ref, ssq_ref, acc_ref = rest
    else:
        o_ref, acc_ref = rest

    k = pl.program_id(2)

    @pl.when(k == 0)
    def _():
        acc_ref[...] = jnp.zeros_like(acc_ref)

    a = a_ref[...]
    if fuse_bn:
        # Consumer-side BN affine (+ReLU) on the already-loaded A tile: VPU work hidden
        # under the MXU, removes a standalone mem-bound BN-apply pass.
        af = a.astype(jnp.float32) * sc_ref[...] + sh_ref[...]
        if relu:
            af = jnp.maximum(af, 0.0)
        if mask_rows is not None:   # only needed on the (never-hit) ragged-M fallback path
            rows = jax.lax.broadcasted_iota(jnp.int32, af.shape, 0) + pl.program_id(0) * tm
            af = jnp.where(rows < mask_rows, af, 0.0)
        a = af.astype(jnp.bfloat16)

    acc_ref[...] += jnp.dot(a, b_ref[...], preferred_element_type=jnp.float32)

    @pl.when(k == pl.num_programs(2) - 1)
    def _():
        acc = acc_ref[...]
        o_ref[...] = acc.astype(o_ref.dtype)
        if stats:
            # Per-(M-block, N-block) partial channel sums for the *output's* BatchNorm.
            sum_ref[...] = jnp.sum(acc, axis=0, keepdims=True)[None]
            ssq_ref[...] = jnp.sum(acc * acc, axis=0, keepdims=True)[None]


def pallas_matmul(a, b, *, out_dtype=jnp.bfloat16, a_scale=None, a_shift=None,
                  a_relu=False, stats=False):
    """a: [M, K]; b: [K, Np]  (K % 128 == 0, Np % 128 == 0).  bf16 MXU GEMM, f32 accumulate.

    Optional fusions:
      * a_scale/a_shift (1, K) f32: BN affine (+ReLU) applied to the A tile in-kernel.
      * stats=True: additionally returns per-M-block channel sum / sum-of-squares of the
        f32 accumulator (shape [M_blocks, 1, Np]) from the GEMM epilogue.
    """
    M, K = a.shape
    K2, Np = b.shape
    assert K == K2 and K % 128 == 0 and Np % 128 == 0, (a.shape, b.shape)
    fuse_bn = a_scale is not None
    if fuse_bn:
        assert a_shift is not None
    a = a.astype(jnp.bfloat16)
    b = b.astype(jnp.bfloat16)

    # M tiling: prefer a divisor of M so no jnp.pad HBM copy is needed.
    if M <= 1024:
        tm, Mp = M, M
    else:
        tm = _largest_divisor_tile(M, 1024, 8)
        if tm is None:                       # ragged fallback (not hit by ResNet shapes)
            tm = 1024
            Mp = _round_up(M, tm)
            a = jnp.pad(a, ((0, Mp - M), (0, 0)))
        else:
            Mp = M
    mask_rows = M if (fuse_bn and Mp != M) else None

    tk = _largest_divisor_tile(K, 512, 128)
    tn = _largest_divisor_tile(Np, 512, 128)
    nbi, nbj, nbk = Mp // tm, Np // tn, K // tk

    in_specs = [pl.BlockSpec((tm, tk), lambda i, j, k: (i, k))]
    args = [a]
    if fuse_bn:
        in_specs += [pl.BlockSpec((1, tk), lambda i, j, k: (0, k)),
                     pl.BlockSpec((1, tk), lambda i, j, k: (0, k))]
        args += [a_scale.astype(jnp.float32), a_shift.astype(jnp.float32)]
    in_specs.append(pl.BlockSpec((tk, tn), lambda i, j, k: (k, j)))
    args.append(b)

    out_shapes = [jax.ShapeDtypeStruct((Mp, Np), out_dtype)]
    out_specs = [pl.BlockSpec((tm, tn), lambda i, j, k: (i, j))]
    if stats:
        out_shapes += [jax.ShapeDtypeStruct((nbi, 1, Np), jnp.float32)] * 2
        out_specs += [pl.BlockSpec((1, 1, tn), lambda i, j, k: (i, 0, j))] * 2

    flops = 2 * Mp * Np * K
    bytes_accessed = (Mp * K + K * Np) * 2 + Mp * Np * jnp.dtype(out_dtype).itemsize

    kernel = functools.partial(_gemm_kernel, fuse_bn=fuse_bn, stats=stats,
                               relu=a_relu, mask_rows=mask_rows, tm=tm)
    result = pl.pallas_call(
        kernel,
        out_shape=tuple(out_shapes) if stats else out_shapes[0],
        grid_spec=pltpu.PrefetchScalarGridSpec(
            num_scalar_prefetch=0,
            grid=(nbi, nbj, nbk),
            in_specs=in_specs,
            out_specs=tuple(out_specs) if stats else out_specs[0],
            scratch_shapes=[pltpu.VMEM((tm, tn), jnp.float32)],
        ),
        compiler_params=pltpu.CompilerParams(
            dimension_semantics=("parallel", "parallel", "arbitrary"),
            vmem_limit_bytes=_GEMM_VMEM_LIMIT_BYTES),
        cost_estimate=pl.CostEstimate(flops=flops, transcendentals=0,
                                      bytes_accessed=bytes_accessed),
    )(*args)

    if stats:
        out, psum, pssq = result
    else:
        out, psum, pssq = result, None, None
    if Mp != M:
        out = out[:M]
    return (out, psum, pssq) if stats else out


def _bn_scale_shift_from_partials(psum, pssq, m_true, gamma, beta):
    """Finish train-mode BN (biased variance) from GEMM-epilogue partial sums; (1, C) f32.
    Note: E[x^2]-E[x]^2 in f32 (documented cancellation caveat, acceptable here)."""
    s = jnp.sum(psum, axis=0)          # (1, C)
    q = jnp.sum(pssq, axis=0)
    mean = s * (1.0 / m_true)
    var = jnp.maximum(q * (1.0 / m_true) - mean * mean, 0.0)
    inv = jax.lax.rsqrt(var + _BN_EPS)
    scale = gamma * inv
    shift = beta - mean * scale
    return scale, shift


# ---------------------------------------------------------------------------
# Elementwise kernels (row-tiled, lane-dense, large blocks)
# ---------------------------------------------------------------------------

def _bn_act_kernel(x_ref, sc_ref, sh_ref, o_ref):
    y = x_ref[...].astype(jnp.float32) * sc_ref[...] + sh_ref[...]
    o_ref[...] = jnp.maximum(y, 0.0).astype(o_ref.dtype)


def _bn_add_relu_kernel(*refs, has_ds):
    if has_ds:
        x_ref, sc_ref, sh_ref, r_ref, rsc_ref, rsh_ref, o_ref = refs
    else:
        x_ref, sc_ref, sh_ref, r_ref, o_ref = refs
    y = x_ref[...].astype(jnp.float32) * sc_ref[...] + sh_ref[...]
    r = r_ref[...].astype(jnp.float32)
    if has_ds:
        r = r * rsc_ref[...] + rsh_ref[...]
    o_ref[...] = jnp.maximum(y + r, 0.0).astype(o_ref.dtype)


def _maxpool_kernel(p00_ref, p01_ref, p10_ref, p11_ref, o_ref):
    """3x3 / stride-2 max pool from stride-2 phase tensors; only unit-offset slices in-kernel."""
    _, Ho, Wo, _ = o_ref.shape
    p00 = p00_ref[0]
    p01 = p01_ref[0]
    p10 = p10_ref[0]
    p11 = p11_ref[0]
    m = p00[:Ho, :Wo, :]
    for t in (p00[:Ho, 1:Wo + 1, :], p00[1:Ho + 1, :Wo, :], p00[1:Ho + 1, 1:Wo + 1, :],
              p01[:Ho, :Wo, :], p01[1:Ho + 1, :Wo, :],
              p10[:Ho, :Wo, :], p10[:Ho, 1:Wo + 1, :],
              p11[:Ho, :Wo, :]):
        m = jnp.maximum(m, t)
    o_ref[0] = m


def _avgpool_kernel(x_ref, o_ref):
    hw = x_ref.shape[1]
    o_ref[0] = jnp.sum(x_ref[0].astype(jnp.float32), axis=0, keepdims=True) * (1.0 / hw)


# ---------------------------------------------------------------------------
# Op wrappers
# ---------------------------------------------------------------------------

@functools.partial(jax.jit, static_argnames=("stride",))
def conv1x1_bn_stats(x_nhwc, w2d, gamma, beta, a_scale, a_shift, *, stride):
    """1x1 conv.  If a_scale/a_shift are given, the producer's BN affine + ReLU is applied to
    the A tile inside the GEMM.  BN stats of *this* conv's output come from the GEMM epilogue.
    Returns (raw conv output NHWC, bn scale, bn shift)."""
    N, H, W, C = x_nhwc.shape
    if stride != 1:
        # TODO(synk): express this stride-2 row selection in the GEMM A BlockSpec instead.
        x_nhwc = x_nhwc[:, ::stride, ::stride, :]
        H, W = x_nhwc.shape[1], x_nhwc.shape[2]
    M = N * H * W
    a = x_nhwc.reshape(M, C)
    out, psum, pssq = pallas_matmul(a, w2d, a_scale=a_scale, a_shift=a_shift,
                                    a_relu=True, stats=True)
    scale, shift = _bn_scale_shift_from_partials(psum, pssq, M, gamma, beta)
    return out.reshape(N, H, W, w2d.shape[1]), scale, shift


@functools.partial(jax.jit, static_argnames=("stride",))
def conv_kxk_bn_stats(x_nhwc, pre_scale, pre_shift, w, gamma, beta, *, stride):
    """KxK conv (K in {3,7}) via explicit bf16 im2col.  The producer's BN affine + ReLU is
    applied inside the XLA-fused im2col expression (rides on im2col traffic, no extra pass).
    w: [K*K, Cin_true, Cout_p].  BN stats of the output come from the GEMM epilogue.
    # TODO(synk): implicit im2col (in-kernel shifted-window DMA) to avoid the patches tensor."""
    N, H, W, C = x_nhwc.shape
    KK, cin, coutp = w.shape
    ksize = int(round(KK ** 0.5))
    pad = (ksize - 1) // 2
    Ho = (H + 2 * pad - ksize) // stride + 1
    Wo = (W + 2 * pad - ksize) // stride + 1

    if pre_scale is not None:
        xf = jnp.maximum(x_nhwc.astype(jnp.float32) * pre_scale + pre_shift, 0.0)
        xf = xf.astype(jnp.bfloat16)
    else:
        xf = x_nhwc
    if cin < C:
        xf = xf[..., :cin]      # drop lane-padding channels: halves K for 64-channel layers

    xp = jnp.pad(xf, ((0, 0), (pad, pad), (pad, pad), (0, 0)))
    cols = []
    for kh in range(ksize):
        for kw in range(ksize):
            cols.append(xp[:, kh:kh + (Ho - 1) * stride + 1:stride,
                              kw:kw + (Wo - 1) * stride + 1:stride, :])
    a = jnp.stack(cols, axis=3).reshape(N * Ho * Wo, KK * cin)

    K0 = KK * cin
    Kp = _round_up(K0, 128)
    w2 = w.reshape(K0, coutp)
    if Kp != K0:   # stem (147->256) and layer1 3x3 (576->640) only; pad fuses with the stack
        a = jnp.pad(a, ((0, 0), (0, Kp - K0)))
        w2 = jnp.pad(w2, ((0, Kp - K0), (0, 0)))

    out, psum, pssq = pallas_matmul(a, w2, stats=True)
    scale, shift = _bn_scale_shift_from_partials(psum, pssq, N * Ho * Wo, gamma, beta)
    return out.reshape(N, Ho, Wo, coutp), scale, shift


@jax.jit
def bn_act(x_nhwc, scale, shift):
    """relu(x * scale + shift); only used once (stem), row-tiled & pipelined."""
    N, H, W, C = x_nhwc.shape
    M = N * H * W
    x2 = x_nhwc.reshape(M, C)
    tmr = _pick_row_tile(M, C)
    Mp = M
    if tmr is None:
        tmr = 4096
        Mp = _round_up(M, tmr)
        x2 = jnp.pad(x2, ((0, Mp - M), (0, 0)))
    row_spec = pl.BlockSpec((tmr, C), lambda i: (i, 0))
    vec_spec = pl.BlockSpec((1, C), lambda i: (0, 0))
    out = pl.pallas_call(
        _bn_act_kernel,
        out_shape=jax.ShapeDtypeStruct((Mp, C), jnp.bfloat16),
        grid_spec=pltpu.PrefetchScalarGridSpec(
            num_scalar_prefetch=0,
            grid=(Mp // tmr,),
            in_specs=[row_spec, vec_spec, vec_spec],
            out_specs=row_spec,
        ),
        compiler_params=pltpu.CompilerParams(dimension_semantics=("parallel",)),
    )(x2, scale, shift)
    if Mp != M:
        out = out[:M]
    return out.reshape(N, H, W, C)


@jax.jit
def bn_add_relu(x_nhwc, scale, shift, res_nhwc, res_scale=None, res_shift=None):
    """relu(bn(x) + [bn(res) | res]) -- the single fused elementwise pass per bottleneck."""
    N, H, W, C = x_nhwc.shape
    M = N * H * W
    x2 = x_nhwc.reshape(M, C)
    r2 = res_nhwc.reshape(M, C)
    has_ds = res_scale is not None
    tmr = _pick_row_tile(M, C)
    Mp = M
    if tmr is None:
        tmr = 4096
        Mp = _round_up(M, tmr)
        x2 = jnp.pad(x2, ((0, Mp - M), (0, 0)))
        r2 = jnp.pad(r2, ((0, Mp - M), (0, 0)))
    row_spec = pl.BlockSpec((tmr, C), lambda i: (i, 0))
    vec_spec = pl.BlockSpec((1, C), lambda i: (0, 0))
    args = [x2, scale, shift, r2]
    in_specs = [row_spec, vec_spec, vec_spec, row_spec]
    if has_ds:
        args += [res_scale, res_shift]
        in_specs += [vec_spec, vec_spec]
    out = pl.pallas_call(
        functools.partial(_bn_add_relu_kernel, has_ds=has_ds),
        out_shape=jax.ShapeDtypeStruct((Mp, C), jnp.bfloat16),
        grid_spec=pltpu.PrefetchScalarGridSpec(
            num_scalar_prefetch=0,
            grid=(Mp // tmr,),
            in_specs=in_specs,
            out_specs=row_spec,
        ),
        compiler_params=pltpu.CompilerParams(dimension_semantics=("parallel",)),
    )(*args)
    if Mp != M:
        out = out[:M]
    return out.reshape(N, H, W, C)


@jax.jit
def maxpool2d(x_nhwc):
    """3x3 / stride-2 / pad-1 max pool. Input is post-ReLU (>=0) so zero padding is exact."""
    N, H, W, C = x_nhwc.shape
    Ho = (H + 2 - 3) // 2 + 1
    Wo = (W + 2 - 3) // 2 + 1
    xp = jnp.pad(x_nhwc, ((0, 0), (1, 1), (1, 1), (0, 0)))
    p00 = xp[:, 0::2, 0::2, :][:, :Ho + 1, :Wo + 1, :]
    p01 = xp[:, 0::2, 1::2, :][:, :Ho + 1, :Wo + 1, :]
    p10 = xp[:, 1::2, 0::2, :][:, :Ho + 1, :Wo + 1, :]
    p11 = xp[:, 1::2, 1::2, :][:, :Ho + 1, :Wo + 1, :]
    in_spec = pl.BlockSpec((1, Ho + 1, Wo + 1, C), lambda n: (n, 0, 0, 0))
    return pl.pallas_call(
        _maxpool_kernel,
        out_shape=jax.ShapeDtypeStruct((N, Ho, Wo, C), x_nhwc.dtype),
        grid_spec=pltpu.PrefetchScalarGridSpec(
            num_scalar_prefetch=0,
            grid=(N,),
            in_specs=[in_spec, in_spec, in_spec, in_spec],
            out_specs=pl.BlockSpec((1, Ho, Wo, C), lambda n: (n, 0, 0, 0)),
        ),
        compiler_params=pltpu.CompilerParams(dimension_semantics=("parallel",)),
    )(p00, p01, p10, p11)


@jax.jit
def global_avgpool(x_nhwc):
    """AdaptiveAvgPool2d((1,1)) -> [N, C] f32; tiled over the batch (parallel)."""
    N, H, W, C = x_nhwc.shape
    x3 = x_nhwc.reshape(N, H * W, C)
    out = pl.pallas_call(
        _avgpool_kernel,
        out_shape=jax.ShapeDtypeStruct((N, 1, C), jnp.float32),
        grid_spec=pltpu.PrefetchScalarGridSpec(
            num_scalar_prefetch=0,
            grid=(N,),
            in_specs=[pl.BlockSpec((1, H * W, C), lambda n: (n, 0, 0))],
            out_specs=pl.BlockSpec((1, 1, C), lambda n: (n, 0, 0)),
        ),
        compiler_params=pltpu.CompilerParams(dimension_semantics=("parallel",)),
    )(x3)
    return out.reshape(N, C)


@jax.jit
def linear(x, w_mat, b):
    # x: [N, 2048] f32; w_mat: [2048, 1024] bf16 (pre-transposed, 1000->1024); b: [1000] f32
    y = pallas_matmul(x, w_mat, out_dtype=jnp.float32)
    return y[:, :b.shape[0]] + b[None, :]


# ---------------------------------------------------------------------------
# ResNet-50 parameters (torchvision topology), pre-laid-out for the kernels
# ---------------------------------------------------------------------------

def _cp(c):
    """Activation channel count padded to a lane-dense multiple of 128."""
    return _round_up(c, 128)


def _prep_conv1x1(key, cout, cin, *, cin_p, cout_p):
    w = jax.random.normal(key, (cout, cin), jnp.float32) * jnp.sqrt(2.0 / cin)
    wm = jnp.pad(w.T, ((0, cin_p - cin), (0, cout_p - cout)))
    return wm.astype(jnp.bfloat16)                       # [Cin_p, Cout_p]


def _prep_conv_kxk(key, cout, cin, k, *, cout_p):
    fan_in = cin * k * k
    w = jax.random.normal(key, (cout, cin, k, k), jnp.float32) * jnp.sqrt(2.0 / fan_in)
    wm = jnp.transpose(w, (2, 3, 1, 0)).reshape(k * k, cin, cout)   # rows ordered (kh, kw, cin)
    wm = jnp.pad(wm, ((0, 0), (0, 0), (0, cout_p - cout)))
    return wm.astype(jnp.bfloat16)                       # [k*k, Cin_true, Cout_p]


def _prep_bn(key, c, c_pad):
    k1, k2 = jax.random.split(key)
    gamma = 1.0 + 0.1 * jax.random.normal(k1, (c,), jnp.float32)
    beta = 0.1 * jax.random.normal(k2, (c,), jnp.float32)
    gamma = jnp.pad(gamma, (0, c_pad - c), constant_values=1.0).reshape(1, c_pad)
    beta = jnp.pad(beta, (0, c_pad - c)).reshape(1, c_pad)   # zero beta keeps padded channels 0
    return gamma, beta


def init_resnet50_params(key):
    cnt = [0]

    def nk():
        cnt[0] += 1
        return jax.random.fold_in(key, cnt[0])

    params = {}
    params["conv1_w"] = _prep_conv_kxk(nk(), 64, 3, 7, cout_p=_cp(64))
    params["bn1_g"], params["bn1_b"] = _prep_bn(nk(), 64, _cp(64))

    cfgs = [(64, 3, 1), (128, 4, 2), (256, 6, 2), (512, 3, 2)]  # (planes, blocks, stride)
    inplanes = 64
    layers = []
    for planes, nblocks, stride in cfgs:
        blocks = []
        for b in range(nblocks):
            s = stride if b == 0 else 1
            bp = {"stride": s}
            bp["conv1_w"] = _prep_conv1x1(nk(), planes, inplanes,
                                          cin_p=_cp(inplanes), cout_p=_cp(planes))
            bp["bn1_g"], bp["bn1_b"] = _prep_bn(nk(), planes, _cp(planes))
            bp["conv2_w"] = _prep_conv_kxk(nk(), planes, planes, 3, cout_p=_cp(planes))
            bp["bn2_g"], bp["bn2_b"] = _prep_bn(nk(), planes, _cp(planes))
            bp["conv3_w"] = _prep_conv1x1(nk(), planes * 4, planes,
                                          cin_p=_cp(planes), cout_p=_cp(planes * 4))
            bp["bn3_g"], bp["bn3_b"] = _prep_bn(nk(), planes * 4, _cp(planes * 4))
            if b == 0:  # downsample branch
                bp["down_w"] = _prep_conv1x1(nk(), planes * 4, inplanes,
                                             cin_p=_cp(inplanes), cout_p=_cp(planes * 4))
                bp["down_g"], bp["down_b"] = _prep_bn(nk(), planes * 4, _cp(planes * 4))
            blocks.append(bp)
            inplanes = planes * 4
        layers.append(blocks)
    params["layers"] = layers

    fc_w = jax.random.normal(nk(), (1000, 2048), jnp.float32) * 0.02
    params["fc_w"] = jnp.pad(fc_w.T, ((0, 0), (0, 1024 - 1000))).astype(jnp.bfloat16)
    params["fc_b"] = 0.01 * jax.random.normal(nk(), (1000,), jnp.float32)
    return params


def bottleneck(x, bp):
    stride = bp["stride"]
    # conv1 (1x1): consumes the already-activated residual-stream input.
    out1, s1, sh1 = conv1x1_bn_stats(x, bp["conv1_w"], bp["bn1_g"], bp["bn1_b"],
                                     None, None, stride=1)
    # conv2 (3x3): bn1+relu folded into the im2col expression of its input.
    out2, s2, sh2 = conv_kxk_bn_stats(out1, s1, sh1, bp["conv2_w"],
                                      bp["bn2_g"], bp["bn2_b"], stride=stride)
    # conv3 (1x1): bn2+relu fused into the GEMM A path.
    out3, s3, sh3 = conv1x1_bn_stats(out2, bp["conv3_w"], bp["bn3_g"], bp["bn3_b"],
                                     s2, sh2, stride=1)
    if "down_w" in bp:
        ds, sd, shd = conv1x1_bn_stats(x, bp["down_w"], bp["down_g"], bp["down_b"],
                                       None, None, stride=stride)
        return bn_add_relu(out3, s3, sh3, ds, sd, shd)
    return bn_add_relu(out3, s3, sh3, x)


def resnet50_forward(params, img_nchw):
    """Matches torchvision resnet50.forward() in train mode; input NCHW, output [N, 1000]."""
    x = jnp.transpose(img_nchw, (0, 2, 3, 1)).astype(jnp.bfloat16)   # NCHW -> NHWC, bf16
    x, s, sh = conv_kxk_bn_stats(x, None, None, params["conv1_w"],
                                 params["bn1_g"], params["bn1_b"], stride=2)
    x = bn_act(x, s, sh)
    x = maxpool2d(x)
    for layer in params["layers"]:
        for bp in layer:
            x = bottleneck(x, bp)
    x = global_avgpool(x)                                 # [N, 2048] f32
    return linear(x, params["fc_w"], params["fc_b"])      # [N, 1000] f32


# ---------------------------------------------------------------------------

if __name__ == "__main__":
    key = jax.random.PRNGKey(0)
    pkey, xkey = jax.random.split(key)
    params = init_resnet50_params(pkey)

    # Small input consistent with ResNet-50 (3-channel image, NCHW).
    img = jax.random.normal(xkey, (2, 3, 32, 32), jnp.float32)

    logits = resnet50_forward(params, img)
    logits = jax.block_until_ready(logits)

    assert logits.shape == (2, 1000), logits.shape
    assert bool(jnp.all(jnp.isfinite(logits)))
    print("KERNEL_OK")
</pallas_src>

<mosaic_0001>
module attributes {stable_mosaic.version = 11 : i64} {
  func.func @_gemm_kernel(%arg0: i32, %arg1: i32, %arg2: i32, %arg3: memref<512x256xbf16, #tpu.memory_space<vmem>>, %arg4: memref<256x128xbf16, #tpu.memory_space<vmem>>, %arg5: memref<512x128xbf16, #tpu.memory_space<vmem>>, %arg6: memref<1x1x128xf32, #tpu.memory_space<vmem>>, %arg7: memref<1x1x128xf32, #tpu.memory_space<vmem>>, %arg8: memref<512x128xf32, #tpu.memory_space<vmem>>) attributes {dimension_semantics = [#tpu.dimension_semantics<parallel>, #tpu.dimension_semantics<parallel>, #tpu.dimension_semantics<arbitrary>], iteration_bounds = array<i64: 1, 1, 1>, scalar_prefetch = 0 : i64, scratch_operands = 1 : i64, tpu.core_type = #tpu.core_type<tc>, window_params = [{transform_indices = @transform_0, window_bounds = array<i64: 512, 256>}, {transform_indices = @transform_1, window_bounds = array<i64: 256, 128>}, {transform_indices = @transform_2, window_bounds = array<i64: 512, 128>}, {transform_indices = @transform_3, window_bounds = array<i64: 1, 1, 128>}, {transform_indices = @transform_4, window_bounds = array<i64: 1, 1, 128>}]} {
    %c0_i32 = arith.constant 0 : i32
    %0 = arith.cmpi eq, %arg2, %c0_i32 : i32
    %1 = arith.extui %0 : i1 to i32
    %c0_i32_0 = arith.constant 0 : i32
    %2 = arith.cmpi ne, %1, %c0_i32_0 : i32
    scf.if %2 {
      %cst_10 = arith.constant 0.000000e+00 : f32
      %12 = vector.broadcast %cst_10 : f32 to vector<512x128xf32>
      %c0_11 = arith.constant 0 : index
      %c0_12 = arith.constant 0 : index
      %13 = vector.load %arg8[%c0_11, %c0_12] : memref<512x128xf32, #tpu.memory_space<vmem>>, vector<512x128xf32>
      tpu.vector_store %arg8[%c0_11, %c0_12], %12 {strides = array<i32>} : memref<512x128xf32, #tpu.memory_space<vmem>>, vector<512x128xf32>,
    } else {
    }
    %c0 = arith.constant 0 : index
    %c0_1 = arith.constant 0 : index
    %3 = vector.load %arg3[%c0, %c0_1] : memref<512x256xbf16, #tpu.memory_space<vmem>>, vector<512x256xbf16>
    %c0_2 = arith.constant 0 : index
    %c0_3 = arith.constant 0 : index
    %4 = vector.load %arg8[%c0_2, %c0_3] : memref<512x128xf32, #tpu.memory_space<vmem>>, vector<512x128xf32>
    %c0_4 = arith.constant 0 : index
    %c0_5 = arith.constant 0 : index
    %5 = vector.load %arg4[%c0_4, %c0_5] : memref<256x128xbf16, #tpu.memory_space<vmem>>, vector<256x128xbf16>
    %cst = arith.constant dense<0.000000e+00> : vector<512x128xf32>
    %6 = tpu.matmul %3, %5, %cst {dimension_numbers = #tpu.dot_dimension_numbers<[1], [0], [0], [1], [0, 0, 1, 1], [], []>} : vector<512x256xbf16>, vector<256x128xbf16>, vector<512x128xf32> -> vector<512x128xf32>
    %7 = arith.addf %4, %6 : vector<512x128xf32>
    %c0_6 = arith.constant 0 : index
    %c0_7 = arith.constant 0 : index
    %8 = vector.load %arg8[%c0_6, %c0_7] : memref<512x128xf32, #tpu.memory_space<vmem>>, vector<512x128xf32>
    tpu.vector_store %arg8[%c0_6, %c0_7], %7 {strides = array<i32>} : memref<512x128xf32, #tpu.memory_space<vmem>>, vector<512x128xf32>,
    %c0_i32_8 = arith.constant 0 : i32
    %9 = arith.cmpi eq, %arg2, %c0_i32_8 : i32
    %10 = arith.extui %9 : i1 to i32
    %c0_i32_9 = arith.constant 0 : i32
    %11 = arith.cmpi ne, %10, %c0_i32_9 : i32
    scf.if %11 {
      %c0_10 = arith.constant 0 : index
      %c0_11 = arith.constant 0 : index
      %12 = vector.load %arg8[%c0_10, %c0_11] : memref<512x128xf32, #tpu.memory_space<vmem>>, vector<512x128xf32>
      %13 = arith.truncf %12 : vector<512x128xf32> to vector<512x128xbf16>
      %c0_12 = arith.constant 0 : index
      %c0_13 = arith.constant 0 : index
      %14 = vector.load %arg5[%c0_12, %c0_13] : memref<512x128xbf16, #tpu.memory_space<vmem>>, vector<512x128xbf16>
      tpu.vector_store %arg5[%c0_12, %c0_13], %13 {strides = array<i32>} : memref<512x128xbf16, #tpu.memory_space<vmem>>, vector<512x128xbf16>,
      %cst_14 = arith.constant dense<0.000000e+00> : vector<128xf32>
      %15 = vector.multi_reduction <add>, %12, %cst_14 [0] : vector<512x128xf32> to vector<128xf32>
      %16 = vector.shape_cast %15 : vector<128xf32> to vector<1x128xf32>
      %17 = vector.shape_cast %16 : vector<1x128xf32> to vector<1x1x128xf32>
      %c0_15 = arith.constant 0 : index
      %c0_16 = arith.constant 0 : index
      %c0_17 = arith.constant 0 : index
      %18 = vector.load %arg6[%c0_15, %c0_16, %c0_17] : memref<1x1x128xf32, #tpu.memory_space<vmem>>, vector<1x1x128xf32>
      tpu.vector_store %arg6[%c0_15, %c0_16, %c0_17], %17 {strides = array<i32>} : memref<1x1x128xf32, #tpu.memory_space<vmem>>, vector<1x1x128xf32>,
      %19 = arith.mulf %12, %12 : vector<512x128xf32>
      %cst_18 = arith.constant dense<0.000000e+00> : vector<128xf32>
      %20 = vector.multi_reduction <add>, %19, %cst_18 [0] : vector<512x128xf32> to vector<128xf32>
      %21 = vector.shape_cast %20 : vector<128xf32> to vector<1x128xf32>
      %22 = vector.shape_cast %21 : vector<1x128xf32> to vector<1x1x128xf32>
      %c0_19 = arith.constant 0 : index
      %c0_20 = arith.constant 0 : index
      %c0_21 = arith.constant 0 : index
      %23 = vector.load %arg7[%c0_19, %c0_20, %c0_21] : memref<1x1x128xf32, #tpu.memory_space<vmem>>, vector<1x1x128xf32>
      tpu.vector_store %arg7[%c0_19, %c0_20, %c0_21], %22 {strides = array<i32>} : memref<1x1x128xf32, #tpu.memory_space<vmem>>, vector<1x1x128xf32>,
    } else {
    }
    return
  }
  func.func @transform_0(%arg0: i32, %arg1: i32, %arg2: i32) -> (i32, i32) {
    %c0_i32 = arith.constant 0 : i32
    return %arg0, %arg2 : i32, i32
  }
  func.func @transform_1(%arg0: i32, %arg1: i32, %arg2: i32) -> (i32, i32) {
    %c0_i32 = arith.constant 0 : i32
    return %arg2, %arg1 : i32, i32
  }
  func.func @transform_2(%arg0: i32, %arg1: i32, %arg2: i32) -> (i32, i32) {
    %c0_i32 = arith.constant 0 : i32
    return %arg0, %arg1 : i32, i32
  }
  func.func @transform_3(%arg0: i32, %arg1: i32, %arg2: i32) -> (i32, i32, i32) {
    %c0_i32 = arith.constant 0 : i32
    %c0_i32_0 = arith.constant 0 : i32
    return %arg0, %c0_i32, %arg1 : i32, i32, i32
  }
  func.func @transform_4(%arg0: i32, %arg1: i32, %arg2: i32) -> (i32, i32, i32) {
    %c0_i32 = arith.constant 0 : i32
    %c0_i32_0 = arith.constant 0 : i32
    return %arg0, %c0_i32, %arg1 : i32, i32, i32
  }
}

</mosaic_0001>

<llo_original>
// kernel: conv_kxk_bn_stats.1
$region0: #{conv_kxk_bn_stats.1}
  #allocation0 [shape = 'u32[]', space=smem, size = 0x4, offset = 0x4, fixed_abs, tag = 'smem constant byte address 0x4 - core index']
  #allocation1 [shape = 'u32[72,128]{1,0:T(1,128)}', space=vmem, size = 0x9000, scoped, tag = 'internal scratch']
  #allocation2 [shape = 'f32[512,128]{1,0:T(8,128)}', space=vmem, size = 0x40000, scoped, tag = 'scratch operand']
  %s0 = inlined_call_operand.vmem [shape: bf16[512,256], index: 0, kind: input, shape index: {}]
  %s1 = inlined_call_operand.vmem [shape: bf16[256,128], index: 1, kind: input, shape index: {}]
  %s2 = inlined_call_operand.hbm [shape: bf16[512,128], index: 2, kind: output, shape index: {0}]
  %s3 = inlined_call_operand.vmem [shape: f32[1,1,128], index: 3, kind: output, shape index: {1}]
  %s4 = inlined_call_operand.vmem [shape: f32[1,1,128], index: 4, kind: output, shape index: {2}]
  %5 = xla_tuple %s2, %s3, %s4
  %s6 = sld [smem:[#allocation0]]
  $region42: #{conv_kxk_bn_stats.1} parent=0
    _
  %s8 = ssub.s32 1, %s6
  %s9 = scalar_select 0, %s8, %s6
  $region1: #{conv_kxk_bn_stats.1} parent=0
    #allocation3 [shape = 'u8[131072]{0}', space=vmem, size = 0x20000, scoped, tag = 'output window, operand 0, single buffered']
    #allocation4 [shape = 's32[1]{0}', space=sflag, size = 0x4, scoped, tag = 'scoped memory for conv_kxk_bn_stats.1']
    %10 = vsyncpa [#allocation4], 0
    // Predicated region
    $region2: #{conv_kxk_bn_stats.1} parent=1 // pred_check
      _
    $region3: #{conv_kxk_bn_stats.1} parent=1 // pred_check_branch
      %12 = sbr.rel (0) target = $region5
    $region4: #{conv_kxk_bn_stats.1} parent=1 // pred_region
      _
    $region5: #{conv_kxk_bn_stats.1} parent=1 // pred_fallthru
      _
    // Predicated region
    $region6: #{conv_kxk_bn_stats.1} parent=1 // pred_check
      _
    $region7: #{conv_kxk_bn_stats.1} parent=1 // pred_check_branch
      %14 = sbr.rel (0) target = $region9
    $region8: #{conv_kxk_bn_stats.1} parent=1 // pred_region
      _
    $region9: #{conv_kxk_bn_stats.1} parent=1 // pred_fallthru
      _
    %p15 = scmp.eq.s32.totalorder 0, 0
    // Predicated region
    $region10: #{conv_kxk_bn_stats.1} parent=1 // pred_check
      %p16 = pneg %p15
    $region11: #{conv_kxk_bn_stats.1} parent=1 // pred_check_branch
      %18 = sbr.rel (%p16) target = $region13
    $region12: #{conv_kxk_bn_stats.1} parent=1 // pred_region
      %19 = vst [vmem:[#allocation2] sm:$0xff] 0.0
      %20 = vst [vmem:[#allocation2 + $0x8] sm:$0xff] 0.0
      %21 = vst [vmem:[#allocation2 + $0x10] sm:$0xff] 0.0
      %22 = vst [vmem:[#allocation2 + $0x18] sm:$0xff] 0.0
      %23 = vst [vmem:[#allocation2 + $0x20] sm:$0xff] 0.0
      %24 = vst [vmem:[#allocation2 + $0x28] sm:$0xff] 0.0
      %25 = vst [vmem:[#allocation2 + $0x30] sm:$0xff] 0.0
      %26 = vst [vmem:[#allocation2 + $0x38] sm:$0xff] 0.0
      %27 = vst [vmem:[#allocation2 + $0x40] sm:$0xff] 0.0
      %28 = vst [vmem:[#allocation2 + $0x48] sm:$0xff] 0.0
      %29 = vst [vmem:[#allocation2 + $0x50] sm:$0xff] 0.0
      %30 = vst [vmem:[#allocation2 + $0x58] sm:$0xff] 0.0
      %31 = vst [vmem:[#allocation2 + $0x60] sm:$0xff] 0.0
      %32 = vst [vmem:[#allocation2 + $0x68] sm:$0xff] 0.0
      %33 = vst [vmem:[#allocation2 + $0x70] sm:$0xff] 0.0
      %34 = vst [vmem:[#allocation2 + $0x78] sm:$0xff] 0.0
      %35 = vst [vmem:[#allocation2 + $0x80] sm:$0xff] 0.0
      %36 = vst [vmem:[#allocation2 + $0x88] sm:$0xff] 0.0
      %37 = vst [vmem:[#allocation2 + $0x90] sm:$0xff] 0.0
      %38 = vst [vmem:[#allocation2 + $0x98] sm:$0xff] 0.0
      %39 = vst [vmem:[#allocation2 + $0xa0] sm:$0xff] 0.0
      %40 = vst [vmem:[#allocation2 + $0xa8] sm:$0xff] 0.0
      %41 = vst [vmem:[#allocation2 + $0xb0] sm:$0xff] 0.0
      %42 = vst [vmem:[#allocation2 + $0xb8] sm:$0xff] 0.0
      %43 = vst [vmem:[#allocation2 + $0xc0] sm:$0xff] 0.0
      %44 = vst [vmem:[#allocation2 + $0xc8] sm:$0xff] 0.0
      %45 = vst [vmem:[#allocation2 + $0xd0] sm:$0xff] 0.0
      %46 = vst [vmem:[#allocation2 + $0xd8] sm:$0xff] 0.0
      %47 = vst [vmem:[#allocation2 + $0xe0] sm:$0xff] 0.0
      %48 = vst [vmem:[#allocation2 + $0xe8] sm:$0xff] 0.0
      %49 = vst [vmem:[#allocation2 + $0xf0] sm:$0xff] 0.0
      %50 = vst [vmem:[#allocation2 + $0xf8] sm:$0xff] 0.0
      %51 = vst [vmem:[#allocation2 + $0x100] sm:$0xff] 0.0
      %52 = vst [vmem:[#allocation2 + $0x108] sm:$0xff] 0.0
      %53 = vst [vmem:[#allocation2 + $0x110] sm:$0xff] 0.0
      %54 = vst [vmem:[#allocation2 + $0x118] sm:$0xff] 0.0
      %55 = vst [vmem:[#allocation2 + $0x120] sm:$0xff] 0.0
      %56 = vst [vmem:[#allocation2 + $0x128] sm:$0xff] 0.0
      %57 = vst [vmem:[#allocation2 + $0x130] sm:$0xff] 0.0
      %58 = vst [vmem:[#allocation2 + $0x138] sm:$0xff] 0.0
      %59 = vst [vmem:[#allocation2 + $0x140] sm:$0xff] 0.0
      %60 = vst [vmem:[#allocation2 + $0x148] sm:$0xff] 0.0
      %61 = vst [vmem:[#allocation2 + $0x150] sm:$0xff] 0.0
      %62 = vst [vmem:[#allocation2 + $0x158] sm:$0xff] 0.0
      %63 = vst [vmem:[#allocation2 + $0x160] sm:$0xff] 0.0
      %64 = vst [vmem:[#allocation2 + $0x168] sm:$0xff] 0.0
      %65 = vst [vmem:[#allocation2 + $0x170] sm:$0xff] 0.0
      %66 = vst [vmem:[#allocation2 + $0x178] sm:$0xff] 0.0
      %67 = vst [vmem:[#allocation2 + $0x180] sm:$0xff] 0.0
      %68 = vst [vmem:[#allocation2 + $0x188] sm:$0xff] 0.0
      %69 = vst [vmem:[#allocation2 + $0x190] sm:$0xff] 0.0
      %70 = vst [vmem:[#allocation2 + $0x198] sm:$0xff] 0.0
      %71 = vst [vmem:[#allocation2 + $0x1a0] sm:$0xff] 0.0
      %72 = vst [vmem:[#allocation2 + $0x1a8] sm:$0xff] 0.0
      %73 = vst [vmem:[#allocation2 + $0x1b0] sm:$0xff] 0.0
      %74 = vst [vmem:[#allocation2 + $0x1b8] sm:$0xff] 0.0
      %75 = vst [vmem:[#allocation2 + $0x1c0] sm:$0xff] 0.0
      %76 = vst [vmem:[#allocation2 + $0x1c8] sm:$0xff] 0.0
      %77 = vst [vmem:[#allocation2 + $0x1d0] sm:$0xff] 0.0
      %78 = vst [vmem:[#allocation2 + $0x1d8] sm:$0xff] 0.0
      %79 = vst [vmem:[#allocation2 + $0x1e0] sm:$0xff] 0.0
      %80 = vst [vmem:[#allocation2 + $0x1e8] sm:$0xff] 0.0
      %81 = vst [vmem:[#allocation2 + $0x1f0] sm:$0xff] 0.0
      %82 = vst [vmem:[#allocation2 + $0x1f8] sm:$0xff] 0.0
    $region13: #{conv_kxk_bn_stats.1} parent=1 // pred_fallthru
      _
    %v83 = vld [vmem:[%s0] sm:$0xff]
    %v84 = vld [vmem:[%s0 + $0x8] sm:$0xff]
    %v85 = vld [vmem:[%s0 + $0x10] sm:$0xff]
    %v86 = vld [vmem:[%s0 + $0x18] sm:$0xff]
    %v87 = vld [vmem:[%s0 + $0x20] sm:$0xff]
    %v88 = vld [vmem:[%s0 + $0x28] sm:$0xff]
    %v89 = vld [vmem:[%s0 + $0x30] sm:$0xff]
    %v90 = vld [vmem:[%s0 + $0x38] sm:$0xff]
    %v91 = vld [vmem:[%s0 + $0x40] sm:$0xff]
    %v92 = vld [vmem:[%s0 + $0x48] sm:$0xff]
    %v93 = vld [vmem:[%s0 + $0x50] sm:$0xff]
    %v94 = vld [vmem:[%s0 + $0x58] sm:$0xff]
    %v95 = vld [vmem:[%s0 + $0x60] sm:$0xff]
    %v96 = vld [vmem:[%s0 + $0x68] sm:$0xff]
    %v97 = vld [vmem:[%s0 + $0x70] sm:$0xff]
    %v98 = vld [vmem:[%s0 + $0x78] sm:$0xff]
    %v99 = vld [vmem:[%s0 + $0x80] sm:$0xff]
    %v100 = vld [vmem:[%s0 + $0x88] sm:$0xff]
    %v101 = vld [vmem:[%s0 + $0x90] sm:$0xff]
    %v102 = vld [vmem:[%s0 + $0x98] sm:$0xff]
    %v103 = vld [vmem:[%s0 + $0xa0] sm:$0xff]
    %v104 = vld [vmem:[%s0 + $0xa8] sm:$0xff]
    %v105 = vld [vmem:[%s0 + $0xb0] sm:$0xff]
    %v106 = vld [vmem:[%s0 + $0xb8] sm:$0xff]
    %v107 = vld [vmem:[%s0 + $0xc0] sm:$0xff]
    %v108 = vld [vmem:[%s0 + $0xc8] sm:$0xff]
    %v109 = vld [vmem:[%s0 + $0xd0] sm:$0xff]
    %v110 = vld [vmem:[%s0 + $0xd8] sm:$0xff]
    %v111 = vld [vmem:[%s0 + $0xe0] sm:$0xff]
    %v112 = vld [vmem:[%s0 + $0xe8] sm:$0xff]
    %v113 = vld [vmem:[%s0 + $0xf0] sm:$0xff]
    %v114 = vld [vmem:[%s0 + $0xf8] sm:$0xff]
    %v115 = vld [vmem:[%s0 + $0x100] sm:$0xff]
    %v116 = vld [vmem:[%s0 + $0x108] sm:$0xff]
    %v117 = vld [vmem:[%s0 + $0x110] sm:$0xff]
    %v118 = vld [vmem:[%s0 + $0x118] sm:$0xff]
    %v119 = vld [vmem:[%s0 + $0x120] sm:$0xff]
    %v120 = vld [vmem:[%s0 + $0x128] sm:$0xff]
    %v121 = vld [vmem:[%s0 + $0x130] sm:$0xff]
    %v122 = vld [vmem:[%s0 + $0x138] sm:$0xff]
    %v123 = vld [vmem:[%s0 + $0x140] sm:$0xff]
    %v124 = vld [vmem:[%s0 + $0x148] sm:$0xff]
    %v125 = vld [vmem:[%s0 + $0x150] sm:$0xff]
    %v126 = vld [vmem:[%s0 + $0x158] sm:$0xff]
    %v127 = vld [vmem:[%s0 + $0x160] sm:$0xff]
    %v128 = vld [vmem:[%s0 + $0x168] sm:$0xff]
    %v129 = vld [vmem:[%s0 + $0x170] sm:$0xff]
    %v130 = vld [vmem:[%s0 + $0x178] sm:$0xff]
    %v131 = vld [vmem:[%s0 + $0x180] sm:$0xff]
    %v132 = vld [vmem:[%s0 + $0x188] sm:$0xff]
    %v133 = vld [vmem:[%s0 + $0x190] sm:$0xff]
    %v134 = vld [vmem:[%s0 + $0x198] sm:$0xff]
    %v135 = vld [vmem:[%s0 + $0x1a0] sm:$0xff]
    %v136 = vld [vmem:[%s0 + $0x1a8] sm:$0xff]
    %v137 = vld [vmem:[%s0 + $0x1b0] sm:$0xff]
    %v138 = vld [vmem:[%s0 + $0x1b8] sm:$0xff]
    %v139 = vld [vmem:[%s0 + $0x1c0] sm:$0xff]
    %v140 = vld [vmem:[%s0 + $0x1c8] sm:$0xff]
    %v141 = vld [vmem:[%s0 + $0x1d0] sm:$0xff]
    %v142 = vld [vmem:[%s0 + $0x1d8] sm:$0xff]
    %v143 = vld [vmem:[%s0 + $0x1e0] sm:$0xff]
    %v144 = vld [vmem:[%s0 + $0x1e8] sm:$0xff]
    %v145 = vld [vmem:[%s0 + $0x1f0] sm:$0xff]
    %v146 = vld [vmem:[%s0 + $0x1f8] sm:$0xff]
    %v147 = vld [vmem:[#allocation2] sm:$0xff]
    %v148 = vld [vmem:[#allocation2 + $0x8] sm:$0xff]
    %v149 = vld [vmem:[#allocation2 + $0x10] sm:$0xff]
    %v150 = vld [vmem:[#allocation2 + $0x18] sm:$0xff]
    %v151 = vld [vmem:[#allocation2 + $0x20] sm:$0xff]
    %v152 = vld [vmem:[#allocation2 + $0x28] sm:$0xff]
    %v153 = vld [vmem:[#allocation2 + $0x30] sm:$0xff]
    %v154 = vld [vmem:[#allocation2 + $0x38] sm:$0xff]
    %v155 = vld [vmem:[#allocation2 + $0x40] sm:$0xff]
    %v156 = vld [vmem:[#allocation2 + $0x48] sm:$0xff]
    %v157 = vld [vmem:[#allocation2 + $0x50] sm:$0xff]
    %v158 = vld [vmem:[#allocation2 + $0x58] sm:$0xff]
    %v159 = vld [vmem:[#allocation2 + $0x60] sm:$0xff]
    %v160 = vld [vmem:[#allocation2 + $0x68] sm:$0xff]
    %v161 = vld [vmem:[#allocation2 + $0x70] sm:$0xff]
    %v162 = vld [vmem:[#allocation2 + $0x78] sm:$0xff]
    %v163 = vld [vmem:[#allocation2 + $0x80] sm:$0xff]
    %v164 = vld [vmem:[#allocation2 + $0x88] sm:$0xff]
    %v165 = vld [vmem:[#allocation2 + $0x90] sm:$0xff]
    %v166 = vld [vmem:[#allocation2 + $0x98] sm:$0xff]
    %v167 = vld [vmem:[#allocation2 + $0xa0] sm:$0xff]
    %v168 = vld [vmem:[#allocation2 + $0xa8] sm:$0xff]
    %v169 = vld [vmem:[#allocation2 + $0xb0] sm:$0xff]
    %v170 = vld [vmem:[#allocation2 + $0xb8] sm:$0xff]
    %v171 = vld [vmem:[#allocation2 + $0xc0] sm:$0xff]
    %v172 = vld [vmem:[#allocation2 + $0xc8] sm:$0xff]
    %v173 = vld [vmem:[#allocation2 + $0xd0] sm:$0xff]
    %v174 = vld [vmem:[#allocation2 + $0xd8] sm:$0xff]
    %v175 = vld [vmem:[#allocation2 + $0xe0] sm:$0xff]
    %v176 = vld [vmem:[#allocation2 + $0xe8] sm:$0xff]
    %v177 = vld [vmem:[#allocation2 + $0xf0] sm:$0xff]
    %v178 = vld [vmem:[#allocation2 + $0xf8] sm:$0xff]
    %v179 = vld [vmem:[#allocation2 + $0x100] sm:$0xff]
    %v180 = vld [vmem:[#allocation2 + $0x108] sm:$0xff]
    %v181 = vld [vmem:[#allocation2 + $0x110] sm:$0xff]
    %v182 = vld [vmem:[#allocation2 + $0x118] sm:$0xff]
    %v183 = vld [vmem:[#allocation2 + $0x120] sm:$0xff]
    %v184 = vld [vmem:[#allocation2 + $0x128] sm:$0xff]
    %v185 = vld [vmem:[#allocation2 + $0x130] sm:$0xff]
    %v186 = vld [vmem:[#allocation2 + $0x138] sm:$0xff]
    %v187 = vld [vmem:[#allocation2 + $0x140] sm:$0xff]
    %v188 = vld [vmem:[#allocation2 + $0x148] sm:$0xff]
    %v189 = vld [vmem:[#allocation2 + $0x150] sm:$0xff]
    %v190 = vld [vmem:[#allocation2 + $0x158] sm:$0xff]
    %v191 = vld [vmem:[#allocation2 + $0x160] sm:$0xff]
    %v192 = vld [vmem:[#allocation2 + $0x168] sm:$0xff]
    %v193 = vld [vmem:[#allocation2 + $0x170] sm:$0xff]
    %v194 = vld [vmem:[#allocation2 + $0x178] sm:$0xff]
    %v195 = vld [vmem:[#allocation2 + $0x180] sm:$0xff]
    %v196 = vld [vmem:[#allocation2 + $0x188] sm:$0xff]
    %v197 = vld [vmem:[#allocation2 + $0x190] sm:$0xff]
    %v198 = vld [vmem:[#allocation2 + $0x198] sm:$0xff]
    %v199 = vld [vmem:[#allocation2 + $0x1a0] sm:$0xff]
    %v200 = vld [vmem:[#allocation2 + $0x1a8] sm:$0xff]
    %v201 = vld [vmem:[#allocation2 + $0x1b0] sm:$0xff]
    %v202 = vld [vmem:[#allocation2 + $0x1b8] sm:$0xff]
    %v203 = vld [vmem:[#allocation2 + $0x1c0] sm:$0xff]
    %v204 = vld [vmem:[#allocation2 + $0x1c8] sm:$0xff]
    %v205 = vld [vmem:[#allocation2 + $0x1d0] sm:$0xff]
    %v206 = vld [vmem:[#allocation2 + $0x1d8] sm:$0xff]
    %v207 = vld [vmem:[#allocation2 + $0x1e0] sm:$0xff]
    %v208 = vld [vmem:[#allocation2 + $0x1e8] sm:$0xff]
    %v209 = vld [vmem:[#allocation2 + $0x1f0] sm:$0xff]
    %v210 = vld [vmem:[#allocation2 + $0x1f8] sm:$0xff]
    %v211 = vld [vmem:[%s1] sm:$0xf]
    %v212 = vld [vmem:[%s1 + $0x4] sm:$0xf]
    %v213 = vld [vmem:[%s1 + $0x8] sm:$0xf]
    %v214 = vld [vmem:[%s1 + $0xc] sm:$0xf]
    %v215 = vld [vmem:[%s1 + $0x10] sm:$0xf]
    %v216 = vld [vmem:[%s1 + $0x14] sm:$0xf]
    %v217 = vld [vmem:[%s1 + $0x18] sm:$0xf]
    %v218 = vld [vmem:[%s1 + $0x1c] sm:$0xf]
    %v219 = vld [vmem:[%s1 + $0x20] sm:$0xf]
    %v220 = vld [vmem:[%s1 + $0x24] sm:$0xf]
    %v221 = vld [vmem:[%s1 + $0x28] sm:$0xf]
    %v222 = vld [vmem:[%s1 + $0x2c] sm:$0xf]
    %v223 = vld [vmem:[%s1 + $0x30] sm:$0xf]
    %v224 = vld [vmem:[%s1 + $0x34] sm:$0xf]
    %v225 = vld [vmem:[%s1 + $0x38] sm:$0xf]
    %v226 = vld [vmem:[%s1 + $0x3c] sm:$0xf]
    %v227 = vld [vmem:[%s1 + $0x40] sm:$0xf]
    %v228 = vld [vmem:[%s1 + $0x44] sm:$0xf]
    %v229 = vld [vmem:[%s1 + $0x48] sm:$0xf]
    %v230 = vld [vmem:[%s1 + $0x4c] sm:$0xf]
    %v231 = vld [vmem:[%s1 + $0x50] sm:$0xf]
    %v232 = vld [vmem:[%s1 + $0x54] sm:$0xf]
    %v233 = vld [vmem:[%s1 + $0x58] sm:$0xf]
    %v234 = vld [vmem:[%s1 + $0x5c] sm:$0xf]
    %v235 = vld [vmem:[%s1 + $0x60] sm:$0xf]
    %v236 = vld [vmem:[%s1 + $0x64] sm:$0xf]
    %v237 = vld [vmem:[%s1 + $0x68] sm:$0xf]
    %v238 = vld [vmem:[%s1 + $0x6c] sm:$0xf]
    %v239 = vld [vmem:[%s1 + $0x70] sm:$0xf]
    %v240 = vld [vmem:[%s1 + $0x74] sm:$0xf]
    %v241 = vld [vmem:[%s1 + $0x78] sm:$0xf]
    %v242 = vld [vmem:[%s1 + $0x7c] sm:$0xf]
    %v307 = vunpack.c.l.b16 %v83
    %v308 = vunpack.c.h.b16 %v83
    %v309 = vunpack.c.l.b16 %v84
    %v310 = vunpack.c.h.b16 %v84
    %v311 = vunpack.c.l.b16 %v85
    %v312 = vunpack.c.h.b16 %v85
    %v313 = vunpack.c.l.b16 %v86
    %v314 = vunpack.c.h.b16 %v86
    %v315 = vunpack.c.l.b16 %v87
    %v316 = vunpack.c.h.b16 %v87
    %v317 = vunpack.c.l.b16 %v88
    %v318 = vunpack.c.h.b16 %v88
    %v319 = vunpack.c.l.b16 %v89
    %v320 = vunpack.c.h.b16 %v89
    %v321 = vunpack.c.l.b16 %v90
    %v322 = vunpack.c.h.b16 %v90
    %v323 = vunpack.c.l.b16 %v91
    %v324 = vunpack.c.h.b16 %v91
    %v325 = vunpack.c.l.b16 %v92
    %v326 = vunpack.c.h.b16 %v92
    %v327 = vunpack.c.l.b16 %v93
    %v328 = vunpack.c.h.b16 %v93
    %v329 = vunpack.c.l.b16 %v94
    %v330 = vunpack.c.h.b16 %v94
    %v331 = vunpack.c.l.b16 %v95
    %v332 = vunpack.c.h.b16 %v95
    %v333 = vunpack.c.l.b16 %v96
    %v334 = vunpack.c.h.b16 %v96
    %v335 = vunpack.c.l.b16 %v97
    %v336 = vunpack.c.h.b16 %v97
    %v337 = vunpack.c.l.b16 %v98
    %v338 = vunpack.c.h.b16 %v98
    %v339 = vunpack.c.l.b16 %v99
    %v340 = vunpack.c.h.b16 %v99
    %v341 = vunpack.c.l.b16 %v100
    %v342 = vunpack.c.h.b16 %v100
    %v343 = vunpack.c.l.b16 %v101
    %v344 = vunpack.c.h.b16 %v101
    %v345 = vunpack.c.l.b16 %v102
    %v346 = vunpack.c.h.b16 %v102
    %v347 = vunpack.c.l.b16 %v103
    %v348 = vunpack.c.h.b16 %v103
    %v349 = vunpack.c.l.b16 %v104
    %v350 = vunpack.c.h.b16 %v104
    %v351 = vunpack.c.l.b16 %v105
    %v352 = vunpack.c.h.b16 %v105
    %v353 = vunpack.c.l.b16 %v106
    %v354 = vunpack.c.h.b16 %v106
    %v355 = vunpack.c.l.b16 %v107
    %v356 = vunpack.c.h.b16 %v107
    %v357 = vunpack.c.l.b16 %v108
    %v358 = vunpack.c.h.b16 %v108
    %v359 = vunpack.c.l.b16 %v109
    %v360 = vunpack.c.h.b16 %v109
    %v361 = vunpack.c.l.b16 %v110
    %v362 = vunpack.c.h.b16 %v110
    %v363 = vunpack.c.l.b16 %v111
    %v364 = vunpack.c.h.b16 %v111
    %v365 = vunpack.c.l.b16 %v112
    %v366 = vunpack.c.h.b16 %v112
    %v367 = vunpack.c.l.b16 %v113
    %v368 = vunpack.c.h.b16 %v113
    %v369 = vunpack.c.l.b16 %v114
    %v370 = vunpack.c.h.b16 %v114
    %v371 = vunpack.c.l.b16 %v115
    %v372 = vunpack.c.h.b16 %v115
    %v373 = vunpack.c.l.b16 %v116
    %v374 = vunpack.c.h.b16 %v116
    %v375 = vunpack.c.l.b16 %v117
    %v376 = vunpack.c.h.b16 %v117
    %v377 = vunpack.c.l.b16 %v118
    %v378 = vunpack.c.h.b16 %v118
    %v379 = vunpack.c.l.b16 %v119
    %v380 = vunpack.c.h.b16 %v119
    %v381 = vunpack.c.l.b16 %v120
    %v382 = vunpack.c.h.b16 %v120
    %v383 = vunpack.c.l.b16 %v121
    %v384 = vunpack.c.h.b16 %v121
    %v385 = vunpack.c.l.b16 %v122
    %v386 = vunpack.c.h.b16 %v122
    %v387 = vunpack.c.l.b16 %v123
    %v388 = vunpack.c.h.b16 %v123
    %v389 = vunpack.c.l.b16 %v124
    %v390 = vunpack.c.h.b16 %v124
    %v391 = vunpack.c.l.b16 %v125
    %v392 = vunpack.c.h.b16 %v125
    %v393 = vunpack.c.l.b16 %v126
    %v394 = vunpack.c.h.b16 %v126
    %v395 = vunpack.c.l.b16 %v127
    %v396 = vunpack.c.h.b16 %v127
    %v397 = vunpack.c.l.b16 %v128
    %v398 = vunpack.c.h.b16 %v128
    %v399 = vunpack.c.l.b16 %v129
    %v400 = vunpack.c.h.b16 %v129
    %v401 = vunpack.c.l.b16 %v130
    %v402 = vunpack.c.h.b16 %v130
    %v403 = vunpack.c.l.b16 %v131
    %v404 = vunpack.c.h.b16 %v131
    %v405 = vunpack.c.l.b16 %v132
    %v406 = vunpack.c.h.b16 %v132
    %v407 = vunpack.c.l.b16 %v133
    %v408 = vunpack.c.h.b16 %v133
    %v409 = vunpack.c.l.b16 %v134
    %v410 = vunpack.c.h.b16 %v134
    %v411 = vunpack.c.l.b16 %v135
    %v412 = vunpack.c.h.b16 %v135
    %v413 = vunpack.c.l.b16 %v136
    %v414 = vunpack.c.h.b16 %v136
    %v415 = vunpack.c.l.b16 %v137
    %v416 = vunpack.c.h.b16 %v137
    %v417 = vunpack.c.l.b16 %v138
    %v418 = vunpack.c.h.b16 %v138
    %v419 = vunpack.c.l.b16 %v139
    %v420 = vunpack.c.h.b16 %v139
    %v421 = vunpack.c.l.b16 %v140
    %v422 = vunpack.c.h.b16 %v140
    %v423 = vunpack.c.l.b16 %v141
    %v424 = vunpack.c.h.b16 %v141
    %v425 = vunpack.c.l.b16 %v142
    %v426 = vunpack.c.h.b16 %v142
    %v427 = vunpack.c.l.b16 %v143
    %v428 = vunpack.c.h.b16 %v143
    %v429 = vunpack.c.l.b16 %v144
    %v430 = vunpack.c.h.b16 %v144
    %v431 = vunpack.c.l.b16 %v145
    %v432 = vunpack.c.h.b16 %v145
    %v433 = vunpack.c.l.b16 %v146
    %v434 = vunpack.c.h.b16 %v146
    %v435 = vpack.c.b16 %v309, %v307
    %v436 = vpack.c.b16 %v310, %v308
    %v437 = vpack.c.b16 %v313, %v311
    %v438 = vpack.c.b16 %v314, %v312
    %v439 = vpack.c.b16 %v317, %v315
    %v440 = vpack.c.b16 %v318, %v316
    %v441 = vpack.c.b16 %v321, %v319
    %v442 = vpack.c.b16 %v322, %v320
    %v443 = vpack.c.b16 %v325, %v323
    %v444 = vpack.c.b16 %v326, %v324
    %v445 = vpack.c.b16 %v329, %v327
    %v446 = vpack.c.b16 %v330, %v328
    %v447 = vpack.c.b16 %v333, %v331
    %v448 = vpack.c.b16 %v334, %v332
    %v449 = vpack.c.b16 %v337, %v335
    %v450 = vpack.c.b16 %v338, %v336
    %v451 = vpack.c.b16 %v341, %v339
    %v452 = vpack.c.b16 %v342, %v340
    %v453 = vpack.c.b16 %v345, %v343
    %v454 = vpack.c.b16 %v346, %v344
    %v455 = vpack.c.b16 %v349, %v347
    %v456 = vpack.c.b16 %v350, %v348
    %v457 = vpack.c.b16 %v353, %v351
    %v458 = vpack.c.b16 %v354, %v352
    %v459 = vpack.c.b16 %v357, %v355
    %v460 = vpack.c.b16 %v358, %v356
    %v461 = vpack.c.b16 %v361, %v359
    %v462 = vpack.c.b16 %v362, %v360
    %v463 = vpack.c.b16 %v365, %v363
    %v464 = vpack.c.b16 %v366, %v364
    %v465 = vpack.c.b16 %v369, %v367
    %v466 = vpack.c.b16 %v370, %v368
    %v467 = vpack.c.b16 %v373, %v371
    %v468 = vpack.c.b16 %v374, %v372
    %v469 = vpack.c.b16 %v377, %v375
    %v470 = vpack.c.b16 %v378, %v376
    %v471 = vpack.c.b16 %v381, %v379
    %v472 = vpack.c.b16 %v382, %v380
    %v473 = vpack.c.b16 %v385, %v383
    %v474 = vpack.c.b16 %v386, %v384
    %v475 = vpack.c.b16 %v389, %v387
    %v476 = vpack.c.b16 %v390, %v388
    %v477 = vpack.c.b16 %v393, %v391
    %v478 = vpack.c.b16 %v394, %v392
    %v479 = vpack.c.b16 %v397, %v395
    %v480 = vpack.c.b16 %v398, %v396
    %v481 = vpack.c.b16 %v401, %v399
    %v482 = vpack.c.b16 %v402, %v400
    %v483 = vpack.c.b16 %v405, %v403
    %v484 = vpack.c.b16 %v406, %v404
    %v485 = vpack.c.b16 %v409, %v407
    %v486 = vpack.c.b16 %v410, %v408
    %v487 = vpack.c.b16 %v413, %v411
    %v488 = vpack.c.b16 %v414, %v412
    %v489 = vpack.c.b16 %v417, %v415
    %v490 = vpack.c.b16 %v418, %v416
    %v491 = vpack.c.b16 %v421, %v419
    %v492 = vpack.c.b16 %v422, %v420
    %v493 = vpack.c.b16 %v425, %v423
    %v494 = vpack.c.b16 %v426, %v424
    %v495 = vpack.c.b16 %v429, %v427
    %v496 = vpack.c.b16 %v430, %v428
    %v497 = vpack.c.b16 %v433, %v431
    %v498 = vpack.c.b16 %v434, %v432
    %v595 = vunpack.c.l.b16 %v211
    %v596 = vunpack.c.l.b16 %v212
    %v597 = vunpack.c.l.b16 %v213
    %v598 = vunpack.c.l.b16 %v214
    %v599 = vunpack.c.l.b16 %v215
    %v600 = vunpack.c.l.b16 %v216
    %v601 = vunpack.c.l.b16 %v217
    %v602 = vunpack.c.l.b16 %v218
    %v603 = vunpack.c.l.b16 %v219
    %v604 = vunpack.c.l.b16 %v220
    %v605 = vunpack.c.l.b16 %v221
    %v606 = vunpack.c.l.b16 %v222
    %v607 = vunpack.c.l.b16 %v223
    %v608 = vunpack.c.l.b16 %v224
    %v609 = vunpack.c.l.b16 %v225
    %v610 = vunpack.c.l.b16 %v226
    %v611 = vunpack.c.l.b16 %v227
    %v612 = vunpack.c.l.b16 %v228
    %v613 = vunpack.c.l.b16 %v229
    %v614 = vunpack.c.l.b16 %v230
    %v615 = vunpack.c.l.b16 %v231
    %v616 = vunpack.c.l.b16 %v232
    %v617 = vunpack.c.l.b16 %v233
    %v618 = vunpack.c.l.b16 %v234
    %v619 = vunpack.c.l.b16 %v235
    %v620 = vunpack.c.l.b16 %v236
    %v621 = vunpack.c.l.b16 %v237
    %v622 = vunpack.c.l.b16 %v238
    %v623 = vunpack.c.l.b16 %v239
    %v624 = vunpack.c.l.b16 %v240
    %v625 = vunpack.c.l.b16 %v241
    %v626 = vunpack.c.l.b16 %v242
    %v627 = vpack.c.b16 %v596, %v595
    %v628 = vpack.c.b16 %v598, %v597
    %v629 = vpack.c.b16 %v600, %v599
    %v630 = vpack.c.b16 %v602, %v601
    %v631 = vpack.c.b16 %v604, %v603
    %v632 = vpack.c.b16 %v606, %v605
    %v633 = vpack.c.b16 %v608, %v607
    %v634 = vpack.c.b16 %v610, %v609
    %v635 = vpack.c.b16 %v612, %v611
    %v636 = vpack.c.b16 %v614, %v613
    %v637 = vpack.c.b16 %v616, %v615
    %v638 = vpack.c.b16 %v618, %v617
    %v639 = vpack.c.b16 %v620, %v619
    %v640 = vpack.c.b16 %v622, %v621
    %v641 = vpack.c.b16 %v624, %v623
    %v642 = vpack.c.b16 %v626, %v625
    %659 = vmatpush.bf16.msra.mxu0 %v634
    %660 = vmatpush.bf16.msra.mxu0 %v633
    %661 = vmatpush.bf16.msra.mxu0 %v632
    %662 = vmatpush.bf16.msra.mxu0 %v631
    %663 = vmatpush.bf16.msra.mxu0 %v630
    %664 = vmatpush.bf16.msra.mxu0 %v629
    %665 = vmatpush.bf16.msra.mxu0 %v628
    %666 = vmatpush.bf16.msra.mxu0 %v627
    %667 = vmatmul.bf16.gmra.mxu0 %v435
    %v668 = vpop.f32.mrf.mxu0
    %v669 = vadd.f32 0.0, %v668
    %v670 = vpop.f32.mrf.mxu0
    %v671 = vadd.f32 0.0, %v670
    %672 = vmatmul.bf16.gmra.mxu0 %v437
    %v673 = vpop.f32.mrf.mxu0
    %v674 = vadd.f32 0.0, %v673
    %v675 = vpop.f32.mrf.mxu0
    %v676 = vadd.f32 0.0, %v675
    %677 = vmatmul.bf16.gmra.mxu0 %v439
    %v678 = vpop.f32.mrf.mxu0
    %v679 = vadd.f32 0.0, %v678
    %v680 = vpop.f32.mrf.mxu0
    %v681 = vadd.f32 0.0, %v680
    %682 = vmatmul.bf16.gmra.mxu0 %v441
    %v683 = vpop.f32.mrf.mxu0
    %v684 = vadd.f32 0.0, %v683
    %v685 = vpop.f32.mrf.mxu0
    %v686 = vadd.f32 0.0, %v685
    %687 = vmatmul.bf16.gmra.mxu0 %v443
    %v688 = vpop.f32.mrf.mxu0
    %v689 = vadd.f32 0.0, %v688
    %v690 = vpop.f32.mrf.mxu0
    %v691 = vadd.f32 0.0, %v690
    %692 = vmatmul.bf16.gmra.mxu0 %v445
    %v693 = vpop.f32.mrf.mxu0
    %v694 = vadd.f32 0.0, %v693
    %v695 = vpop.f32.mrf.mxu0
    %v696 = vadd.f32 0.0, %v695
    %697 = vmatmul.bf16.gmra.mxu0 %v447
    %v698 = vpop.f32.mrf.mxu0
    %v699 = vadd.f32 0.0, %v698
    %v700 = vpop.f32.mrf.mxu0
    %v701 = vadd.f32 0.0, %v700
    %702 = vmatmul.bf16.gmra.mxu0 %v449
    %v703 = vpop.f32.mrf.mxu0
    %v704 = vadd.f32 0.0, %v703
    %v705 = vpop.f32.mrf.mxu0
    %v706 = vadd.f32 0.0, %v705
    %707 = vmatmul.bf16.gmra.mxu0 %v451
    %v708 = vpop.f32.mrf.mxu0
    %v709 = vadd.f32 0.0, %v708
    %v710 = vpop.f32.mrf.mxu0
    %v711 = vadd.f32 0.0, %v710
    %712 = vmatmul.bf16.gmra.mxu0 %v453
    %v713 = vpop.f32.mrf.mxu0
    %v714 = vadd.f32 0.0, %v713
    %v715 = vpop.f32.mrf.mxu0
    %v716 = vadd.f32 0.0, %v715
    %717 = vmatmul.bf16.gmra.mxu0 %v455
    %v718 = vpop.f32.mrf.mxu0
    %v719 = vadd.f32 0.0, %v718
    %v720 = vpop.f32.mrf.mxu0
    %v721 = vadd.f32 0.0, %v720
    %722 = vmatmul.bf16.gmra.mxu0 %v457
    %v723 = vpop.f32.mrf.mxu0
    %v724 = vadd.f32 0.0, %v723
    %v725 = vpop.f32.mrf.mxu0
    %v726 = vadd.f32 0.0, %v725
    %727 = vmatmul.bf16.gmra.mxu0 %v459
    %v728 = vpop.f32.mrf.mxu0
    %v729 = vadd.f32 0.0, %v728
    %v730 = vpop.f32.mrf.mxu0
    %v731 = vadd.f32 0.0, %v730
    %732 = vmatmul.bf16.gmra.mxu0 %v461
    %v733 = vpop.f32.mrf.mxu0
    %v734 = vadd.f32 0.0, %v733
    %v735 = vpop.f32.mrf.mxu0
    %v736 = vadd.f32 0.0, %v735
    %737 = vmatmul.bf16.gmra.mxu0 %v463
    %v738 = vpop.f32.mrf.mxu0
    %v739 = vadd.f32 0.0, %v738
    %v740 = vpop.f32.mrf.mxu0
    %v741 = vadd.f32 0.0, %v740
    %742 = vmatmul.bf16.gmra.mxu0 %v465
    %v743 = vpop.f32.mrf.mxu0
    %v744 = vadd.f32 0.0, %v743
    %v745 = vpop.f32.mrf.mxu0
    %v746 = vadd.f32 0.0, %v745
    %747 = vmatmul.bf16.gmra.mxu0 %v467
    %v748 = vpop.f32.mrf.mxu0
    %v749 = vadd.f32 0.0, %v748
    %v750 = vpop.f32.mrf.mxu0
    %v751 = vadd.f32 0.0, %v750
    %752 = vmatmul.bf16.gmra.mxu0 %v469
    %v753 = vpop.f32.mrf.mxu0
    %v754 = vadd.f32 0.0, %v753
    %v755 = vpop.f32.mrf.mxu0
    %v756 = vadd.f32 0.0, %v755
    %757 = vmatmul.bf16.gmra.mxu0 %v471
    %v758 = vpop.f32.mrf.mxu0
    %v759 = vadd.f32 0.0, %v758
    %v760 = vpop.f32.mrf.mxu0
    %v761 = vadd.f32 0.0, %v760
    %762 = vmatmul.bf16.gmra.mxu0 %v473
    %v763 = vpop.f32.mrf.mxu0
    %v764 = vadd.f32 0.0, %v763
    %v765 = vpop.f32.mrf.mxu0
    %v766 = vadd.f32 0.0, %v765
    %767 = vmatmul.bf16.gmra.mxu0 %v475
    %v768 = vpop.f32.mrf.mxu0
    %v769 = vadd.f32 0.0, %v768
    %v770 = vpop.f32.mrf.mxu0
    %v771 = vadd.f32 0.0, %v770
    %772 = vmatmul.bf16.gmra.mxu0 %v477
    %v773 = vpop.f32.mrf.mxu0
    %v774 = vadd.f32 0.0, %v773
    %v775 = vpop.f32.mrf.mxu0
    %v776 = vadd.f32 0.0, %v775
    %777 = vmatmul.bf16.gmra.mxu0 %v479
    %v778 = vpop.f32.mrf.mxu0
    %v779 = vadd.f32 0.0, %v778
    %v780 = vpop.f32.mrf.mxu0
    %v781 = vadd.f32 0.0, %v780
    %782 = vmatmul.bf16.gmra.mxu0 %v481
    %v783 = vpop.f32.mrf.mxu0
    %v784 = vadd.f32 0.0, %v783
    %v785 = vpop.f32.mrf.mxu0
    %v786 = vadd.f32 0.0, %v785
    %787 = vmatmul.bf16.gmra.mxu0 %v483
    %v788 = vpop.f32.mrf.mxu0
    %v789 = vadd.f32 0.0, %v788
    %v790 = vpop.f32.mrf.mxu0
    %v791 = vadd.f32 0.0, %v790
    %792 = vmatmul.bf16.gmra.mxu0 %v485
    %v793 = vpop.f32.mrf.mxu0
    %v794 = vadd.f32 0.0, %v793
    %v795 = vpop.f32.mrf.mxu0
    %v796 = vadd.f32 0.0, %v795
    %797 = vmatmul.bf16.gmra.mxu0 %v487
    %v798 = vpop.f32.mrf.mxu0
    %v799 = vadd.f32 0.0, %v798
    %v800 = vpop.f32.mrf.mxu0
    %v801 = vadd.f32 0.0, %v800
    %802 = vmatmul.bf16.gmra.mxu0 %v489
    %v803 = vpop.f32.mrf.mxu0
    %v804 = vadd.f32 0.0, %v803
    %v805 = vpop.f32.mrf.mxu0
    %v806 = vadd.f32 0.0, %v805
    %807 = vmatmul.bf16.gmra.mxu0 %v491
    %v808 = vpop.f32.mrf.mxu0
    %v809 = vadd.f32 0.0, %v808
    %v810 = vpop.f32.mrf.mxu0
    %v811 = vadd.f32 0.0, %v810
    %812 = vmatmul.bf16.gmra.mxu0 %v493
    %v813 = vpop.f32.mrf.mxu0
    %v814 = vadd.f32 0.0, %v813
    %v815 = vpop.f32.mrf.mxu0
    %v816 = vadd.f32 0.0, %v815
    %817 = vmatmul.bf16.gmra.mxu0 %v495
    %v818 = vpop.f32.mrf.mxu0
    %v819 = vadd.f32 0.0, %v818
    %v820 = vpop.f32.mrf.mxu0
    %v821 = vadd.f32 0.0, %v820
    %822 = vmatmul.bf16.gmra.mxu0 %v497
    %v823 = vpop.f32.mrf.mxu0
    %v824 = vadd.f32 0.0, %v823
    %v825 = vpop.f32.mrf.mxu0
    %v826 = vadd.f32 0.0, %v825
    %827 = vdwg.mxu0
    %828 = vmatpush.bf16.msra.mxu0 %v642
    %829 = vmatpush.bf16.msra.mxu0 %v641
    %830 = vmatpush.bf16.msra.mxu0 %v640
    %831 = vmatpush.bf16.msra.mxu0 %v639
    %832 = vmatpush.bf16.msra.mxu0 %v638
    %833 = vmatpush.bf16.msra.mxu0 %v637
    %834 = vmatpush.bf16.msra.mxu0 %v636
    %835 = vmatpush.bf16.msra.mxu0 %v635
    %836 = vmatmul.bf16.gmra.mxu0 %v436
    %v837 = vpop.f32.mrf.mxu0
    %v838 = vadd.f32 %v669, %v837
    %v839 = vpop.f32.mrf.mxu0
    %v840 = vadd.f32 %v671, %v839
    %841 = vmatmul.bf16.gmra.mxu0 %v438
    %v842 = vpop.f32.mrf.mxu0
    %v843 = vadd.f32 %v674, %v842
    %v844 = vpop.f32.mrf.mxu0
    %v845 = vadd.f32 %v676, %v844
    %846 = vmatmul.bf16.gmra.mxu0 %v440
    %v847 = vpop.f32.mrf.mxu0
    %v848 = vadd.f32 %v679, %v847
    %v849 = vpop.f32.mrf.mxu0
    %v850 = vadd.f32 %v681, %v849
    %851 = vmatmul.bf16.gmra.mxu0 %v442
    %v852 = vpop.f32.mrf.mxu0
    %v853 = vadd.f32 %v684, %v852
    %v854 = vpop.f32.mrf.mxu0
    %v855 = vadd.f32 %v686, %v854
    %856 = vmatmul.bf16.gmra.mxu0 %v444
    %v857 = vpop.f32.mrf.mxu0
    %v858 = vadd.f32 %v689, %v857
    %v859 = vpop.f32.mrf.mxu0
    %v860 = vadd.f32 %v691, %v859
    %861 = vmatmul.bf16.gmra.mxu0 %v446
    %v862 = vpop.f32.mrf.mxu0
    %v863 = vadd.f32 %v694, %v862
    %v864 = vpop.f32.mrf.mxu0
    %v865 = vadd.f32 %v696, %v864
    %866 = vmatmul.bf16.gmra.mxu0 %v448
    %v867 = vpop.f32.mrf.mxu0
    %v868 = vadd.f32 %v699, %v867
    %v869 = vpop.f32.mrf.mxu0
    %v870 = vadd.f32 %v701, %v869
    %871 = vmatmul.bf16.gmra.mxu0 %v450
    %v872 = vpop.f32.mrf.mxu0
    %v873 = vadd.f32 %v704, %v872
    %v874 = vpop.f32.mrf.mxu0
    %v875 = vadd.f32 %v706, %v874
    %876 = vmatmul.bf16.gmra.mxu0 %v452
    %v877 = vpop.f32.mrf.mxu0
    %v878 = vadd.f32 %v709, %v877
    %v879 = vpop.f32.mrf.mxu0
    %v880 = vadd.f32 %v711, %v879
    %881 = vmatmul.bf16.gmra.mxu0 %v454
    %v882 = vpop.f32.mrf.mxu0
    %v883 = vadd.f32 %v714, %v882
    %v884 = vpop.f32.mrf.mxu0
    %v885 = vadd.f32 %v716, %v884
    %886 = vmatmul.bf16.gmra.mxu0 %v456
    %v887 = vpop.f32.mrf.mxu0
    %v888 = vadd.f32 %v719, %v887
    %v889 = vpop.f32.mrf.mxu0
    %v890 = vadd.f32 %v721, %v889
    %891 = vmatmul.bf16.gmra.mxu0 %v458
    %v892 = vpop.f32.mrf.mxu0
    %v893 = vadd.f32 %v724, %v892
    %v894 = vpop.f32.mrf.mxu0
    %v895 = vadd.f32 %v726, %v894
    %896 = vmatmul.bf16.gmra.mxu0 %v460
    %v897 = vpop.f32.mrf.mxu0
    %v898 = vadd.f32 %v729, %v897
    %v899 = vpop.f32.mrf.mxu0
    %v900 = vadd.f32 %v731, %v899
    %901 = vmatmul.bf16.gmra.mxu0 %v462
    %v902 = vpop.f32.mrf.mxu0
    %v903 = vadd.f32 %v734, %v902
    %v904 = vpop.f32.mrf.mxu0
    %v905 = vadd.f32 %v736, %v904
    %906 = vmatmul.bf16.gmra.mxu0 %v464
    %v907 = vpop.f32.mrf.mxu0
    %v908 = vadd.f32 %v739, %v907
    %v909 = vpop.f32.mrf.mxu0
    %v910 = vadd.f32 %v741, %v909
    %911 = vmatmul.bf16.gmra.mxu0 %v466
    %v912 = vpop.f32.mrf.mxu0
    %v913 = vadd.f32 %v744, %v912
    %v914 = vpop.f32.mrf.mxu0
    %v915 = vadd.f32 %v746, %v914
    %916 = vmatmul.bf16.gmra.mxu0 %v468
    %v917 = vpop.f32.mrf.mxu0
    %v918 = vadd.f32 %v749, %v917
    %v919 = vpop.f32.mrf.mxu0
    %v920 = vadd.f32 %v751, %v919
    %921 = vmatmul.bf16.gmra.mxu0 %v470
    %v922 = vpop.f32.mrf.mxu0
    %v923 = vadd.f32 %v754, %v922
    %v924 = vpop.f32.mrf.mxu0
    %v925 = vadd.f32 %v756, %v924
    %926 = vmatmul.bf16.gmra.mxu0 %v472
    %v927 = vpop.f32.mrf.mxu0
    %v928 = vadd.f32 %v759, %v927
    %v929 = vpop.f32.mrf.mxu0
    %v930 = vadd.f32 %v761, %v929
    %931 = vmatmul.bf16.gmra.mxu0 %v474
    %v932 = vpop.f32.mrf.mxu0
    %v933 = vadd.f32 %v764, %v932
    %v934 = vpop.f32.mrf.mxu0
    %v935 = vadd.f32 %v766, %v934
    %936 = vmatmul.bf16.gmra.mxu0 %v476
    %v937 = vpop.f32.mrf.mxu0
    %v938 = vadd.f32 %v769, %v937
    %v939 = vpop.f32.mrf.mxu0
    %v940 = vadd.f32 %v771, %v939
    %941 = vmatmul.bf16.gmra.mxu0 %v478
    %v942 = vpop.f32.mrf.mxu0
    %v943 = vadd.f32 %v774, %v942
    %v944 = vpop.f32.mrf.mxu0
    %v945 = vadd.f32 %v776, %v944
    %946 = vmatmul.bf16.gmra.mxu0 %v480
    %v947 = vpop.f32.mrf.mxu0
    %v948 = vadd.f32 %v779, %v947
    %v949 = vpop.f32.mrf.mxu0
    %v950 = vadd.f32 %v781, %v949
    %951 = vmatmul.bf16.gmra.mxu0 %v482
    %v952 = vpop.f32.mrf.mxu0
    %v953 = vadd.f32 %v784, %v952
    %v954 = vpop.f32.mrf.mxu0
    %v955 = vadd.f32 %v786, %v954
    %956 = vmatmul.bf16.gmra.mxu0 %v484
    %v957 = vpop.f32.mrf.mxu0
    %v958 = vadd.f32 %v789, %v957
    %v959 = vpop.f32.mrf.mxu0
    %v960 = vadd.f32 %v791, %v959
    %961 = vmatmul.bf16.gmra.mxu0 %v486
    %v962 = vpop.f32.mrf.mxu0
    %v963 = vadd.f32 %v794, %v962
    %v964 = vpop.f32.mrf.mxu0
    %v965 = vadd.f32 %v796, %v964
    %966 = vmatmul.bf16.gmra.mxu0 %v488
    %v967 = vpop.f32.mrf.mxu0
    %v968 = vadd.f32 %v799, %v967
    %v969 = vpop.f32.mrf.mxu0
    %v970 = vadd.f32 %v801, %v969
    %971 = vmatmul.bf16.gmra.mxu0 %v490
    %v972 = vpop.f32.mrf.mxu0
    %v973 = vadd.f32 %v804, %v972
    %v974 = vpop.f32.mrf.mxu0
    %v975 = vadd.f32 %v806, %v974
    %976 = vmatmul.bf16.gmra.mxu0 %v492
    %v977 = vpop.f32.mrf.mxu0
    %v978 = vadd.f32 %v809, %v977
    %v979 = vpop.f32.mrf.mxu0
    %v980 = vadd.f32 %v811, %v979
    %981 = vmatmul.bf16.gmra.mxu0 %v494
    %v982 = vpop.f32.mrf.mxu0
    %v983 = vadd.f32 %v814, %v982
    %v984 = vpop.f32.mrf.mxu0
    %v985 = vadd.f32 %v816, %v984
    %986 = vmatmul.bf16.gmra.mxu0 %v496
    %v987 = vpop.f32.mrf.mxu0
    %v988 = vadd.f32 %v819, %v987
    %v989 = vpop.f32.mrf.mxu0
    %v990 = vadd.f32 %v821, %v989
    %991 = vmatmul.bf16.gmra.mxu0 %v498
    %v992 = vpop.f32.mrf.mxu0
    %v993 = vadd.f32 %v824, %v992
    %v994 = vpop.f32.mrf.mxu0
    %v995 = vadd.f32 %v826, %v994
    %996 = vdwg.mxu0
    %v997 = vadd.f32 %v147, %v838
    %v998 = vadd.f32 %v148, %v840
    %v999 = vadd.f32 %v149, %v843
    %v1000 = vadd.f32 %v150, %v845
    %v1001 = vadd.f32 %v151, %v848
    %v1002 = vadd.f32 %v152, %v850
    %v1003 = vadd.f32 %v153, %v853
    %v1004 = vadd.f32 %v154, %v855
    %v1005 = vadd.f32 %v155, %v858
    %v1006 = vadd.f32 %v156, %v860
    %v1007 = vadd.f32 %v157, %v863
    %v1008 = vadd.f32 %v158, %v865
    %v1009 = vadd.f32 %v159, %v868
    %v1010 = vadd.f32 %v160, %v870
    %v1011 = vadd.f32 %v161, %v873
    %v1012 = vadd.f32 %v162, %v875
    %v1013 = vadd.f32 %v163, %v878
    %v1014 = vadd.f32 %v164, %v880
    %v1015 = vadd.f32 %v165, %v883
    %v1016 = vadd.f32 %v166, %v885
    %v1017 = vadd.f32 %v167, %v888
    %v1018 = vadd.f32 %v168, %v890
    %v1019 = vadd.f32 %v169, %v893
    %v1020 = vadd.f32 %v170, %v895
    %v1021 = vadd.f32 %v171, %v898
    %v1022 = vadd.f32 %v172, %v900
    %v1023 = vadd.f32 %v173, %v903
    %v1024 = vadd.f32 %v174, %v905
    %v1025 = vadd.f32 %v175, %v908
    %v1026 = vadd.f32 %v176, %v910
    %v1027 = vadd.f32 %v177, %v913
    %v1028 = vadd.f32 %v178, %v915
    %v1029 = vadd.f32 %v179, %v918
    %v1030 = vadd.f32 %v180, %v920
    %v1031 = vadd.f32 %v181, %v923
    %v1032 = vadd.f32 %v182, %v925
    %v1033 = vadd.f32 %v183, %v928
    %v1034 = vadd.f32 %v184, %v930
    %v1035 = vadd.f32 %v185, %v933
    %v1036 = vadd.f32 %v186, %v935
    %v1037 = vadd.f32 %v187, %v938
    %v1038 = vadd.f32 %v188, %v940
    %v1039 = vadd.f32 %v189, %v943
    %v1040 = vadd.f32 %v190, %v945
    %v1041 = vadd.f32 %v191, %v948
    %v1042 = vadd.f32 %v192, %v950
    %v1043 = vadd.f32 %v193, %v953
    %v1044 = vadd.f32 %v194, %v955
    %v1045 = vadd.f32 %v195, %v958
    %v1046 = vadd.f32 %v196, %v960
    %v1047 = vadd.f32 %v197, %v963
    %v1048 = vadd.f32 %v198, %v965
    %v1049 = vadd.f32 %v199, %v968
    %v1050 = vadd.f32 %v200, %v970
    %v1051 = vadd.f32 %v201, %v973
    %v1052 = vadd.f32 %v202, %v975
    %v1053 = vadd.f32 %v203, %v978
    %v1054 = vadd.f32 %v204, %v980
    %v1055 = vadd.f32 %v205, %v983
    %v1056 = vadd.f32 %v206, %v985
    %v1057 = vadd.f32 %v207, %v988
    %v1058 = vadd.f32 %v208, %v990
    %v1059 = vadd.f32 %v209, %v993
    %v1060 = vadd.f32 %v210, %v995
    %1061 = vst [vmem:[#allocation2] sm:$0xff] %v997
    %1062 = vst [vmem:[#allocation2 + $0x8] sm:$0xff] %v998
    %1063 = vst [vmem:[#allocation2 + $0x10] sm:$0xff] %v999
    %1064 = vst [vmem:[#allocation2 + $0x18] sm:$0xff] %v1000
    %1065 = vst [vmem:[#allocation2 + $0x20] sm:$0xff] %v1001
    %1066 = vst [vmem:[#allocation2 + $0x28] sm:$0xff] %v1002
    %1067 = vst [vmem:[#allocation2 + $0x30] sm:$0xff] %v1003
    %1068 = vst [vmem:[#allocation2 + $0x38] sm:$0xff] %v1004
    %1069 = vst [vmem:[#allocation2 + $0x40] sm:$0xff] %v1005
    %1070 = vst [vmem:[#allocation2 + $0x48] sm:$0xff] %v1006
    %1071 = vst [vmem:[#allocation2 + $0x50] sm:$0xff] %v1007
    %1072 = vst [vmem:[#allocation2 + $0x58] sm:$0xff] %v1008
    %1073 = vst [vmem:[#allocation2 + $0x60] sm:$0xff] %v1009
    %1074 = vst [vmem:[#allocation2 + $0x68] sm:$0xff] %v1010
    %1075 = vst [vmem:[#allocation2 + $0x70] sm:$0xff] %v1011
    %1076 = vst [vmem:[#allocation2 + $0x78] sm:$0xff] %v1012
    %1077 = vst [vmem:[#allocation2 + $0x80] sm:$0xff] %v1013
    %1078 = vst [vmem:[#allocation2 + $0x88] sm:$0xff] %v1014
    %1079 = vst [vmem:[#allocation2 + $0x90] sm:$0xff] %v1015
    %1080 = vst [vmem:[#allocation2 + $0x98] sm:$0xff] %v1016
    %1081 = vst [vmem:[#allocation2 + $0xa0] sm:$0xff] %v1017
    %1082 = vst [vmem:[#allocation2 + $0xa8] sm:$0xff] %v1018
    %1083 = vst [vmem:[#allocation2 + $0xb0] sm:$0xff] %v1019
    %1084 = vst [vmem:[#allocation2 + $0xb8] sm:$0xff] %v1020
    %1085 = vst [vmem:[#allocation2 + $0xc0] sm:$0xff] %v1021
    %1086 = vst [vmem:[#allocation2 + $0xc8] sm:$0xff] %v1022
    %1087 = vst [vmem:[#allocation2 + $0xd0] sm:$0xff] %v1023
    %1088 = vst [vmem:[#allocation2 + $0xd8] sm:$0xff] %v1024
    %1089 = vst [vmem:[#allocation2 + $0xe0] sm:$0xff] %v1025
    %1090 = vst [vmem:[#allocation2 + $0xe8] sm:$0xff] %v1026
    %1091 = vst [vmem:[#allocation2 + $0xf0] sm:$0xff] %v1027
    %1092 = vst [vmem:[#allocation2 + $0xf8] sm:$0xff] %v1028
    %1093 = vst [vmem:[#allocation2 + $0x100] sm:$0xff] %v1029
    %1094 = vst [vmem:[#allocation2 + $0x108] sm:$0xff] %v1030
    %1095 = vst [vmem:[#allocation2 + $0x110] sm:$0xff] %v1031
    %1096 = vst [vmem:[#allocation2 + $0x118] sm:$0xff] %v1032
    %1097 = vst [vmem:[#allocation2 + $0x120] sm:$0xff] %v1033
    %1098 = vst [vmem:[#allocation2 + $0x128] sm:$0xff] %v1034
    %1099 = vst [vmem:[#allocation2 + $0x130] sm:$0xff] %v1035
    %1100 = vst [vmem:[#allocation2 + $0x138] sm:$0xff] %v1036
    %1101 = vst [vmem:[#allocation2 + $0x140] sm:$0xff] %v1037
    %1102 = vst [vmem:[#allocation2 + $0x148] sm:$0xff] %v1038
    %1103 = vst [vmem:[#allocation2 + $0x150] sm:$0xff] %v1039
    %1104 = vst [vmem:[#allocation2 + $0x158] sm:$0xff] %v1040
    %1105 = vst [vmem:[#allocation2 + $0x160] sm:$0xff] %v1041
    %1106 = vst [vmem:[#allocation2 + $0x168] sm:$0xff] %v1042
    %1107 = vst [vmem:[#allocation2 + $0x170] sm:$0xff] %v1043
    %1108 = vst [vmem:[#allocation2 + $0x178] sm:$0xff] %v1044
    %1109 = vst [vmem:[#allocation2 + $0x180] sm:$0xff] %v1045
    %1110 = vst [vmem:[#allocation2 + $0x188] sm:$0xff] %v1046
    %1111 = vst [vmem:[#allocation2 + $0x190] sm:$0xff] %v1047
    %1112 = vst [vmem:[#allocation2 + $0x198] sm:$0xff] %v1048
    %1113 = vst [vmem:[#allocation2 + $0x1a0] sm:$0xff] %v1049
    %1114 = vst [vmem:[#allocation2 + $0x1a8] sm:$0xff] %v1050
    %1115 = vst [vmem:[#allocation2 + $0x1b0] sm:$0xff] %v1051
    %1116 = vst [vmem:[#allocation2 + $0x1b8] sm:$0xff] %v1052
    %1117 = vst [vmem:[#allocation2 + $0x1c0] sm:$0xff] %v1053
    %1118 = vst [vmem:[#allocation2 + $0x1c8] sm:$0xff] %v1054
    %1119 = vst [vmem:[#allocation2 + $0x1d0] sm:$0xff] %v1055
    %1120 = vst [vmem:[#allocation2 + $0x1d8] sm:$0xff] %v1056
    %1121 = vst [vmem:[#allocation2 + $0x1e0] sm:$0xff] %v1057
    %1122 = vst [vmem:[#allocation2 + $0x1e8] sm:$0xff] %v1058
    %1123 = vst [vmem:[#allocation2 + $0x1f0] sm:$0xff] %v1059
    %1124 = vst [vmem:[#allocation2 + $0x1f8] sm:$0xff] %v1060
    // Predicated region
    $region14: #{conv_kxk_bn_stats.1} parent=1 // pred_check
      %p1125 = pneg %p15
    $region15: #{conv_kxk_bn_stats.1} parent=1 // pred_check_branch
      %1127 = sbr.rel (%p1125) target = $region17
    $region16: #{conv_kxk_bn_stats.1} parent=1 // pred_region
      %v1128 = vld [vmem:[#allocation2] sm:$0xff]
      %v1129 = vld [vmem:[#allocation2 + $0x8] sm:$0xff]
      %v1130 = vld [vmem:[#allocation2 + $0x10] sm:$0xff]
      %v1131 = vld [vmem:[#allocation2 + $0x18] sm:$0xff]
      %v1132 = vld [vmem:[#allocation2 + $0x20] sm:$0xff]
      %v1133 = vld [vmem:[#allocation2 + $0x28] sm:$0xff]
      %v1134 = vld [vmem:[#allocation2 + $0x30] sm:$0xff]
      %v1135 = vld [vmem:[#allocation2 + $0x38] sm:$0xff]
      %v1136 = vld [vmem:[#allocation2 + $0x40] sm:$0xff]
      %v1137 = vld [vmem:[#allocation2 + $0x48] sm:$0xff]
      %v1138 = vld [vmem:[#allocation2 + $0x50] sm:$0xff]
      %v1139 = vld [vmem:[#allocation2 + $0x58] sm:$0xff]
      %v1140 = vld [vmem:[#allocation2 + $0x60] sm:$0xff]
      %v1141 = vld [vmem:[#allocation2 + $0x68] sm:$0xff]
      %v1142 = vld [vmem:[#allocation2 + $0x70] sm:$0xff]
      %v1143 = vld [vmem:[#allocation2 + $0x78] sm:$0xff]
      %v1144 = vld [vmem:[#allocation2 + $0x80] sm:$0xff]
      %v1145 = vld [vmem:[#allocation2 + $0x88] sm:$0xff]
      %v1146 = vld [vmem:[#allocation2 + $0x90] sm:$0xff]
      %v1147 = vld [vmem:[#allocation2 + $0x98] sm:$0xff]
      %v1148 = vld [vmem:[#allocation2 + $0xa0] sm:$0xff]
      %v1149 = vld [vmem:[#allocation2 + $0xa8] sm:$0xff]
      %v1150 = vld [vmem:[#allocation2 + $0xb0] sm:$0xff]
      %v1151 = vld [vmem:[#allocation2 + $0xb8] sm:$0xff]
      %v1152 = vld [vmem:[#allocation2 + $0xc0] sm:$0xff]
      %v1153 = vld [vmem:[#allocation2 + $0xc8] sm:$0xff]
      %v1154 = vld [vmem:[#allocation2 + $0xd0] sm:$0xff]
      %v1155 = vld [vmem:[#allocation2 + $0xd8] sm:$0xff]
      %v1156 = vld [vmem:[#allocation2 + $0xe0] sm:$0xff]
      %v1157 = vld [vmem:[#allocation2 + $0xe8] sm:$0xff]
      %v1158 = vld [vmem:[#allocation2 + $0xf0] sm:$0xff]
      %v1159 = vld [vmem:[#allocation2 + $0xf8] sm:$0xff]
      %v1160 = vld [vmem:[#allocation2 + $0x100] sm:$0xff]
      %v1161 = vld [vmem:[#allocation2 + $0x108] sm:$0xff]
      %v1162 = vld [vmem:[#allocation2 + $0x110] sm:$0xff]
      %v1163 = vld [vmem:[#allocation2 + $0x118] sm:$0xff]
      %v1164 = vld [vmem:[#allocation2 + $0x120] sm:$0xff]
      %v1165 = vld [vmem:[#allocation2 + $0x128] sm:$0xff]
      %v1166 = vld [vmem:[#allocation2 + $0x130] sm:$0xff]
      %v1167 = vld [vmem:[#allocation2 + $0x138] sm:$0xff]
      %v1168 = vld [vmem:[#allocation2 + $0x140] sm:$0xff]
      %v1169 = vld [vmem:[#allocation2 + $0x148] sm:$0xff]
      %v1170 = vld [vmem:[#allocation2 + $0x150] sm:$0xff]
      %v1171 = vld [vmem:[#allocation2 + $0x158] sm:$0xff]
      %v1172 = vld [vmem:[#allocation2 + $0x160] sm:$0xff]
      %v1173 = vld [vmem:[#allocation2 + $0x168] sm:$0xff]
      %v1174 = vld [vmem:[#allocation2 + $0x170] sm:$0xff]
      %v1175 = vld [vmem:[#allocation2 + $0x178] sm:$0xff]
      %v1176 = vld [vmem:[#allocation2 + $0x180] sm:$0xff]
      %v1177 = vld [vmem:[#allocation2 + $0x188] sm:$0xff]
      %v1178 = vld [vmem:[#allocation2 + $0x190] sm:$0xff]
      %v1179 = vld [vmem:[#allocation2 + $0x198] sm:$0xff]
      %v1180 = vld [vmem:[#allocation2 + $0x1a0] sm:$0xff]
      %v1181 = vld [vmem:[#allocation2 + $0x1a8] sm:$0xff]
      %v1182 = vld [vmem:[#allocation2 + $0x1b0] sm:$0xff]
      %v1183 = vld [vmem:[#allocation2 + $0x1b8] sm:$0xff]
      %v1184 = vld [vmem:[#allocation2 + $0x1c0] sm:$0xff]
      %v1185 = vld [vmem:[#allocation2 + $0x1c8] sm:$0xff]
      %v1186 = vld [vmem:[#allocation2 + $0x1d0] sm:$0xff]
      %v1187 = vld [vmem:[#allocation2 + $0x1d8] sm:$0xff]
      %v1188 = vld [vmem:[#allocation2 + $0x1e0] sm:$0xff]
      %v1189 = vld [vmem:[#allocation2 + $0x1e8] sm:$0xff]
      %v1190 = vld [vmem:[#allocation2 + $0x1f0] sm:$0xff]
      %v1191 = vld [vmem:[#allocation2 + $0x1f8] sm:$0xff]
      %v1192 = vpack.c.bf16 %v1128, %v1128
      %v1193 = vpack.c.bf16 %v1129, %v1129
      %v1194 = vpack.c.bf16 %v1130, %v1130
      %v1195 = vpack.c.bf16 %v1131, %v1131
      %v1196 = vpack.c.bf16 %v1132, %v1132
      %v1197 = vpack.c.bf16 %v1133, %v1133
      %v1198 = vpack.c.bf16 %v1134, %v1134
      %v1199 = vpack.c.bf16 %v1135, %v1135
      %v1200 = vpack.c.bf16 %v1136, %v1136
      %v1201 = vpack.c.bf16 %v1137, %v1137
      %v1202 = vpack.c.bf16 %v1138, %v1138
      %v1203 = vpack.c.bf16 %v1139, %v1139
      %v1204 = vpack.c.bf16 %v1140, %v1140
      %v1205 = vpack.c.bf16 %v1141, %v1141
      %v1206 = vpack.c.bf16 %v1142, %v1142
      %v1207 = vpack.c.bf16 %v1143, %v1143
      %v1208 = vpack.c.bf16 %v1144, %v1144
      %v1209 = vpack.c.bf16 %v1145, %v1145
      %v1210 = vpack.c.bf16 %v1146, %v1146
      %v1211 = vpack.c.bf16 %v1147, %v1147
      %v1212 = vpack.c.bf16 %v1148, %v1148
      %v1213 = vpack.c.bf16 %v1149, %v1149
      %v1214 = vpack.c.bf16 %v1150, %v1150
      %v1215 = vpack.c.bf16 %v1151, %v1151
      %v1216 = vpack.c.bf16 %v1152, %v1152
      %v1217 = vpack.c.bf16 %v1153, %v1153
      %v1218 = vpack.c.bf16 %v1154, %v1154
      %v1219 = vpack.c.bf16 %v1155, %v1155
      %v1220 = vpack.c.bf16 %v1156, %v1156
      %v1221 = vpack.c.bf16 %v1157, %v1157
      %v1222 = vpack.c.bf16 %v1158, %v1158
      %v1223 = vpack.c.bf16 %v1159, %v1159
      %v1224 = vpack.c.bf16 %v1160, %v1160
      %v1225 = vpack.c.bf16 %v1161, %v1161
      %v1226 = vpack.c.bf16 %v1162, %v1162
      %v1227 = vpack.c.bf16 %v1163, %v1163
      %v1228 = vpack.c.bf16 %v1164, %v1164
      %v1229 = vpack.c.bf16 %v1165, %v1165
      %v1230 = vpack.c.bf16 %v1166, %v1166
      %v1231 = vpack.c.bf16 %v1167, %v1167
      %v1232 = vpack.c.bf16 %v1168, %v1168
      %v1233 = vpack.c.bf16 %v1169, %v1169
      %v1234 = vpack.c.bf16 %v1170, %v1170
      %v1235 = vpack.c.bf16 %v1171, %v1171
      %v1236 = vpack.c.bf16 %v1172, %v1172
      %v1237 = vpack.c.bf16 %v1173, %v1173
      %v1238 = vpack.c.bf16 %v1174, %v1174
      %v1239 = vpack.c.bf16 %v1175, %v1175
      %v1240 = vpack.c.bf16 %v1176, %v1176
      %v1241 = vpack.c.bf16 %v1177, %v1177
      %v1242 = vpack.c.bf16 %v1178, %v1178
      %v1243 = vpack.c.bf16 %v1179, %v1179
      %v1244 = vpack.c.bf16 %v1180, %v1180
      %v1245 = vpack.c.bf16 %v1181, %v1181
      %v1246 = vpack.c.bf16 %v1182, %v1182
      %v1247 = vpack.c.bf16 %v1183, %v1183
      %v1248 = vpack.c.bf16 %v1184, %v1184
      %v1249 = vpack.c.bf16 %v1185, %v1185
      %v1250 = vpack.c.bf16 %v1186, %v1186
      %v1251 = vpack.c.bf16 %v1187, %v1187
      %v1252 = vpack.c.bf16 %v1188, %v1188
      %v1253 = vpack.c.bf16 %v1189, %v1189
      %v1254 = vpack.c.bf16 %v1190, %v1190
      %v1255 = vpack.c.bf16 %v1191, %v1191
      %1256 = vst [vmem:[#allocation3] sm:$0xf] %v1192
      %1257 = vst [vmem:[#allocation3 + $0x4] sm:$0xf] %v1193
      %1258 = vst [vmem:[#allocation3 + $0x8] sm:$0xf] %v1194
      %1259 = vst [vmem:[#allocation3 + $0xc] sm:$0xf] %v1195
      %1260 = vst [vmem:[#allocation3 + $0x10] sm:$0xf] %v1196
      %1261 = vst [vmem:[#allocation3 + $0x14] sm:$0xf] %v1197
      %1262 = vst [vmem:[#allocation3 + $0x18] sm:$0xf] %v1198
      %1263 = vst [vmem:[#allocation3 + $0x1c] sm:$0xf] %v1199
      %1264 = vst [vmem:[#allocation3 + $0x20] sm:$0xf] %v1200
      %1265 = vst [vmem:[#allocation3 + $0x24] sm:$0xf] %v1201
      %1266 = vst [vmem:[#allocation3 + $0x28] sm:$0xf] %v1202
      %1267 = vst [vmem:[#allocation3 + $0x2c] sm:$0xf] %v1203
      %1268 = vst [vmem:[#allocation3 + $0x30] sm:$0xf] %v1204
      %1269 = vst [vmem:[#allocation3 + $0x34] sm:$0xf] %v1205
      %1270 = vst [vmem:[#allocation3 + $0x38] sm:$0xf] %v1206
      %1271 = vst [vmem:[#allocation3 + $0x3c] sm:$0xf] %v1207
      %1272 = vst [vmem:[#allocation3 + $0x40] sm:$0xf] %v1208
      %1273 = vst [vmem:[#allocation3 + $0x44] sm:$0xf] %v1209
      %1274 = vst [vmem:[#allocation3 + $0x48] sm:$0xf] %v1210
      %1275 = vst [vmem:[#allocation3 + $0x4c] sm:$0xf] %v1211
      %1276 = vst [vmem:[#allocation3 + $0x50] sm:$0xf] %v1212
      %1277 = vst [vmem:[#allocation3 + $0x54] sm:$0xf] %v1213
      %1278 = vst [vmem:[#allocation3 + $0x58] sm:$0xf] %v1214
      %1279 = vst [vmem:[#allocation3 + $0x5c] sm:$0xf] %v1215
      %1280 = vst [vmem:[#allocation3 + $0x60] sm:$0xf] %v1216
      %1281 = vst [vmem:[#allocation3 + $0x64] sm:$0xf] %v1217
      %1282 = vst [vmem:[#allocation3 + $0x68] sm:$0xf] %v1218
      %1283 = vst [vmem:[#allocation3 + $0x6c] sm:$0xf] %v1219
      %1284 = vst [vmem:[#allocation3 + $0x70] sm:$0xf] %v1220
      %1285 = vst [vmem:[#allocation3 + $0x74] sm:$0xf] %v1221
      %1286 = vst [vmem:[#allocation3 + $0x78] sm:$0xf] %v1222
      %1287 = vst [vmem:[#allocation3 + $0x7c] sm:$0xf] %v1223
      %1288 = vst [vmem:[#allocation3 + $0x80] sm:$0xf] %v1224
      %1289 = vst [vmem:[#allocation3 + $0x84] sm:$0xf] %v1225
      %1290 = vst [vmem:[#allocation3 + $0x88] sm:$0xf] %v1226
      %1291 = vst [vmem:[#allocation3 + $0x8c] sm:$0xf] %v1227
      %1292 = vst [vmem:[#allocation3 + $0x90] sm:$0xf] %v1228
      %1293 = vst [vmem:[#allocation3 + $0x94] sm:$0xf] %v1229
      %1294 = vst [vmem:[#allocation3 + $0x98] sm:$0xf] %v1230
      %1295 = vst [vmem:[#allocation3 + $0x9c] sm:$0xf] %v1231
      %1296 = vst [vmem:[#allocation3 + $0xa0] sm:$0xf] %v1232
      %1297 = vst [vmem:[#allocation3 + $0xa4] sm:$0xf] %v1233
      %1298 = vst [vmem:[#allocation3 + $0xa8] sm:$0xf] %v1234
      %1299 = vst [vmem:[#allocation3 + $0xac] sm:$0xf] %v1235
      %1300 = vst [vmem:[#allocation3 + $0xb0] sm:$0xf] %v1236
      %1301 = vst [vmem:[#allocation3 + $0xb4] sm:$0xf] %v1237
      %1302 = vst [vmem:[#allocation3 + $0xb8] sm:$0xf] %v1238
      %1303 = vst [vmem:[#allocation3 + $0xbc] sm:$0xf] %v1239
      %1304 = vst [vmem:[#allocation3 + $0xc0] sm:$0xf] %v1240
      %1305 = vst [vmem:[#allocation3 + $0xc4] sm:$0xf] %v1241
      %1306 = vst [vmem:[#allocation3 + $0xc8] sm:$0xf] %v1242
      %1307 = vst [vmem:[#allocation3 + $0xcc] sm:$0xf] %v1243
      %1308 = vst [vmem:[#allocation3 + $0xd0] sm:$0xf] %v1244
      %1309 = vst [vmem:[#allocation3 + $0xd4] sm:$0xf] %v1245
      %1310 = vst [vmem:[#allocation3 + $0xd8] sm:$0xf] %v1246
      %1311 = vst [vmem:[#allocation3 + $0xdc] sm:$0xf] %v1247
      %1312 = vst [vmem:[#allocation3 + $0xe0] sm:$0xf] %v1248
      %1313 = vst [vmem:[#allocation3 + $0xe4] sm:$0xf] %v1249
      %1314 = vst [vmem:[#allocation3 + $0xe8] sm:$0xf] %v1250
      %1315 = vst [vmem:[#allocation3 + $0xec] sm:$0xf] %v1251
      %1316 = vst [vmem:[#allocation3 + $0xf0] sm:$0xf] %v1252
      %1317 = vst [vmem:[#allocation3 + $0xf4] sm:$0xf] %v1253
      %1318 = vst [vmem:[#allocation3 + $0xf8] sm:$0xf] %v1254
      %1319 = vst [vmem:[#allocation3 + $0xfc] sm:$0xf] %v1255
      %v1320 = vadd.f32 %v1128, %v1129
      %v1321 = vadd.f32 %v1320, %v1130
      %v1322 = vadd.f32 %v1321, %v1131
      %v1323 = vadd.f32 %v1322, %v1132
      %v1324 = vadd.f32 %v1323, %v1133
      %v1325 = vadd.f32 %v1324, %v1134
      %v1326 = vadd.f32 %v1325, %v1135
      %v1327 = vadd.f32 %v1326, %v1136
      %v1328 = vadd.f32 %v1327, %v1137
      %v1329 = vadd.f32 %v1328, %v1138
      %v1330 = vadd.f32 %v1329, %v1139
      %v1331 = vadd.f32 %v1330, %v1140
      %v1332 = vadd.f32 %v1331, %v1141
      %v1333 = vadd.f32 %v1332, %v1142
      %v1334 = vadd.f32 %v1333, %v1143
      %v1335 = vadd.f32 %v1334, %v1144
      %v1336 = vadd.f32 %v1335, %v1145
      %v1337 = vadd.f32 %v1336, %v1146
      %v1338 = vadd.f32 %v1337, %v1147
      %v1339 = vadd.f32 %v1338, %v1148
      %v1340 = vadd.f32 %v1339, %v1149
      %v1341 = vadd.f32 %v1340, %v1150
      %v1342 = vadd.f32 %v1341, %v1151
      %v1343 = vadd.f32 %v1342, %v1152
      %v1344 = vadd.f32 %v1343, %v1153
      %v1345 = vadd.f32 %v1344, %v1154
      %v1346 = vadd.f32 %v1345, %v1155
      %v1347 = vadd.f32 %v1346, %v1156
      %v1348 = vadd.f32 %v1347, %v1157
      %v1349 = vadd.f32 %v1348, %v1158
      %v1350 = vadd.f32 %v1349, %v1159
      %v1351 = vadd.f32 %v1350, %v1160
      %v1352 = vadd.f32 %v1351, %v1161
      %v1353 = vadd.f32 %v1352, %v1162
      %v1354 = vadd.f32 %v1353, %v1163
      %v1355 = vadd.f32 %v1354, %v1164
      %v1356 = vadd.f32 %v1355, %v1165
      %v1357 = vadd.f32 %v1356, %v1166
      %v1358 = vadd.f32 %v1357, %v1167
      %v1359 = vadd.f32 %v1358, %v1168
      %v1360 = vadd.f32 %v1359, %v1169
      %v1361 = vadd.f32 %v1360, %v1170
      %v1362 = vadd.f32 %v1361, %v1171
      %v1363 = vadd.f32 %v1362, %v1172
      %v1364 = vadd.f32 %v1363, %v1173
      %v1365 = vadd.f32 %v1364, %v1174
      %v1366 = vadd.f32 %v1365, %v1175
      %v1367 = vadd.f32 %v1366, %v1176
      %v1368 = vadd.f32 %v1367, %v1177
      %v1369 = vadd.f32 %v1368, %v1178
      %v1370 = vadd.f32 %v1369, %v1179
      %v1371 = vadd.f32 %v1370, %v1180
      %v1372 = vadd.f32 %v1371, %v1181
      %v1373 = vadd.f32 %v1372, %v1182
      %v1374 = vadd.f32 %v1373, %v1183
      %v1375 = vadd.f32 %v1374, %v1184
      %v1376 = vadd.f32 %v1375, %v1185
      %v1377 = vadd.f32 %v1376, %v1186
      %v1378 = vadd.f32 %v1377, %v1187
      %v1379 = vadd.f32 %v1378, %v1188
      %v1380 = vadd.f32 %v1379, %v1189
      %v1381 = vadd.f32 %v1380, %v1190
      %v1382 = vadd.f32 %v1381, %v1191
      %v1383 = vrot.slane %v1382, 4
      %v1384 = vadd.f32 %v1382, %v1383
      %v1385 = vrot.slane %v1384, 2
      %v1386 = vadd.f32 %v1384, %v1385
      %v1387 = vrot.slane %v1386, 1
      %v1388 = vadd.f32 %v1386, %v1387
      %1389 = vst [vmem:[%s3] sm:$0x1] %v1388
      %v1390 = vmul.f32 %v1128, %v1128
      %v1391 = vmul.f32 %v1129, %v1129
      %v1392 = vmul.f32 %v1130, %v1130
      %v1393 = vmul.f32 %v1131, %v1131
      %v1394 = vmul.f32 %v1132, %v1132
      %v1395 = vmul.f32 %v1133, %v1133
      %v1396 = vmul.f32 %v1134, %v1134
      %v1397 = vmul.f32 %v1135, %v1135
      %v1398 = vmul.f32 %v1136, %v1136
      %v1399 = vmul.f32 %v1137, %v1137
      %v1400 = vmul.f32 %v1138, %v1138
      %v1401 = vmul.f32 %v1139, %v1139
      %v1402 = vmul.f32 %v1140, %v1140
      %v1403 = vmul.f32 %v1141, %v1141
      %v1404 = vmul.f32 %v1142, %v1142
      %v1405 = vmul.f32 %v1143, %v1143
      %v1406 = vmul.f32 %v1144, %v1144
      %v1407 = vmul.f32 %v1145, %v1145
      %v1408 = vmul.f32 %v1146, %v1146
      %v1409 = vmul.f32 %v1147, %v1147
      %v1410 = vmul.f32 %v1148, %v1148
      %v1411 = vmul.f32 %v1149, %v1149
      %v1412 = vmul.f32 %v1150, %v1150
      %v1413 = vmul.f32 %v1151, %v1151
      %v1414 = vmul.f32 %v1152, %v1152
      %v1415 = vmul.f32 %v1153, %v1153
      %v1416 = vmul.f32 %v1154, %v1154
      %v1417 = vmul.f32 %v1155, %v1155
      %v1418 = vmul.f32 %v1156, %v1156
      %v1419 = vmul.f32 %v1157, %v1157
      %v1420 = vmul.f32 %v1158, %v1158
      %v1421 = vmul.f32 %v1159, %v1159
      %v1422 = vmul.f32 %v1160, %v1160
      %v1423 = vmul.f32 %v1161, %v1161
      %v1424 = vmul.f32 %v1162, %v1162
      %v1425 = vmul.f32 %v1163, %v1163
      %v1426 = vmul.f32 %v1164, %v1164
      %v1427 = vmul.f32 %v1165, %v1165
      %v1428 = vmul.f32 %v1166, %v1166
      %v1429 = vmul.f32 %v1167, %v1167
      %v1430 = vmul.f32 %v1168, %v1168
      %v1431 = vmul.f32 %v1169, %v1169
      %v1432 = vmul.f32 %v1170, %v1170
      %v1433 = vmul.f32 %v1171, %v1171
      %v1434 = vmul.f32 %v1172, %v1172
      %v1435 = vmul.f32 %v1173, %v1173
      %v1436 = vmul.f32 %v1174, %v1174
      %v1437 = vmul.f32 %v1175, %v1175
      %v1438 = vmul.f32 %v1176, %v1176
      %v1439 = vmul.f32 %v1177, %v1177
      %v1440 = vmul.f32 %v1178, %v1178
      %v1441 = vmul.f32 %v1179, %v1179
      %v1442 = vmul.f32 %v1180, %v1180
      %v1443 = vmul.f32 %v1181, %v1181
      %v1444 = vmul.f32 %v1182, %v1182
      %v1445 = vmul.f32 %v1183, %v1183
      %v1446 = vmul.f32 %v1184, %v1184
      %v1447 = vmul.f32 %v1185, %v1185
      %v1448 = vmul.f32 %v1186, %v1186
      %v1449 = vmul.f32 %v1187, %v1187
      %v1450 = vmul.f32 %v1188, %v1188
      %v1451 = vmul.f32 %v1189, %v1189
      %v1452 = vmul.f32 %v1190, %v1190
      %v1453 = vmul.f32 %v1191, %v1191
      %v1454 = vadd.f32 %v1390, %v1391
      %v1455 = vadd.f32 %v1454, %v1392
      %v1456 = vadd.f32 %v1455, %v1393
      %v1457 = vadd.f32 %v1456, %v1394
      %v1458 = vadd.f32 %v1457, %v1395
      %v1459 = vadd.f32 %v1458, %v1396
      %v1460 = vadd.f32 %v1459, %v1397
      %v1461 = vadd.f32 %v1460, %v1398
      %v1462 = vadd.f32 %v1461, %v1399
      %v1463 = vadd.f32 %v1462, %v1400
      %v1464 = vadd.f32 %v1463, %v1401
      %v1465 = vadd.f32 %v1464, %v1402
      %v1466 = vadd.f32 %v1465, %v1403
      %v1467 = vadd.f32 %v1466, %v1404
      %v1468 = vadd.f32 %v1467, %v1405
      %v1469 = vadd.f32 %v1468, %v1406
      %v1470 = vadd.f32 %v1469, %v1407
      %v1471 = vadd.f32 %v1470, %v1408
      %v1472 = vadd.f32 %v1471, %v1409
      %v1473 = vadd.f32 %v1472, %v1410
      %v1474 = vadd.f32 %v1473, %v1411
      %v1475 = vadd.f32 %v1474, %v1412
      %v1476 = vadd.f32 %v1475, %v1413
      %v1477 = vadd.f32 %v1476, %v1414
      %v1478 = vadd.f32 %v1477, %v1415
      %v1479 = vadd.f32 %v1478, %v1416
      %v1480 = vadd.f32 %v1479, %v1417
      %v1481 = vadd.f32 %v1480, %v1418
      %v1482 = vadd.f32 %v1481, %v1419
      %v1483 = vadd.f32 %v1482, %v1420
      %v1484 = vadd.f32 %v1483, %v1421
      %v1485 = vadd.f32 %v1484, %v1422
      %v1486 = vadd.f32 %v1485, %v1423
      %v1487 = vadd.f32 %v1486, %v1424
      %v1488 = vadd.f32 %v1487, %v1425
      %v1489 = vadd.f32 %v1488, %v1426
      %v1490 = vadd.f32 %v1489, %v1427
      %v1491 = vadd.f32 %v1490, %v1428
      %v1492 = vadd.f32 %v1491, %v1429
      %v1493 = vadd.f32 %v1492, %v1430
      %v1494 = vadd.f32 %v1493, %v1431
      %v1495 = vadd.f32 %v1494, %v1432
      %v1496 = vadd.f32 %v1495, %v1433
      %v1497 = vadd.f32 %v1496, %v1434
      %v1498 = vadd.f32 %v1497, %v1435
      %v1499 = vadd.f32 %v1498, %v1436
      %v1500 = vadd.f32 %v1499, %v1437
      %v1501 = vadd.f32 %v1500, %v1438
      %v1502 = vadd.f32 %v1501, %v1439
      %v1503 = vadd.f32 %v1502, %v1440
      %v1504 = vadd.f32 %v1503, %v1441
      %v1505 = vadd.f32 %v1504, %v1442
      %v1506 = vadd.f32 %v1505, %v1443
      %v1507 = vadd.f32 %v1506, %v1444
      %v1508 = vadd.f32 %v1507, %v1445
      %v1509 = vadd.f32 %v1508, %v1446
      %v1510 = vadd.f32 %v1509, %v1447
      %v1511 = vadd.f32 %v1510, %v1448
      %v1512 = vadd.f32 %v1511, %v1449
      %v1513 = vadd.f32 %v1512, %v1450
      %v1514 = vadd.f32 %v1513, %v1451
      %v1515 = vadd.f32 %v1514, %v1452
      %v1516 = vadd.f32 %v1515, %v1453
      %v1517 = vrot.slane %v1516, 4
      %v1518 = vadd.f32 %v1516, %v1517
      %v1519 = vrot.slane %v1518, 2
      %v1520 = vadd.f32 %v1518, %v1519
      %v1521 = vrot.slane %v1520, 1
      %v1522 = vadd.f32 %v1520, %v1521
      %1523 = vst [vmem:[%s4] sm:$0x1] %v1522
    $region17: #{conv_kxk_bn_stats.1} parent=1 // pred_fallthru
      _
    // Predicated region
    $region18: #{conv_kxk_bn_stats.1} parent=1 // pred_check
      _
    $region19: #{conv_kxk_bn_stats.1} parent=1 // pred_check_branch
      %1525 = sbr.rel (0) target = $region21
    $region20: #{conv_kxk_bn_stats.1} parent=1 // pred_region
      %1527 = vsyncadd [#allocation4], 0
      %s1528 = sshll.u32 [#allocation3], 4
      %s1529 = int_to_ptr.vmem [resolvable:$true] %s1528
      %s1530 = sshll.u32 %s2, 4
      %s1531 = int_to_ptr.hbm [resolvable:$true] %s1530
      %1536 = dma.vmem_to_hbm [thread:$0]  %s1529, 4096, %s1531, [#allocation4], 64, 64, 4
    $region21: #{conv_kxk_bn_stats.1} parent=1 // pred_fallthru
      _
    // Predicated region
    $region22: #{conv_kxk_bn_stats.1} parent=1 // pred_check
      _
    $region23: #{conv_kxk_bn_stats.1} parent=1 // pred_check_branch
      %1538 = sbr.rel (0) target = $region25
    $region24: #{conv_kxk_bn_stats.1} parent=1 // pred_region
      _
    $region25: #{conv_kxk_bn_stats.1} parent=1 // pred_fallthru
      _
    // Predicated region
    $region26: #{conv_kxk_bn_stats.1} parent=1 // pred_check
      _
    $region27: #{conv_kxk_bn_stats.1} parent=1 // pred_check_branch
      %1540 = sbr.rel (0) target = $region29
    $region28: #{conv_kxk_bn_stats.1} parent=1 // pred_region
      _
    $region29: #{conv_kxk_bn_stats.1} parent=1 // pred_fallthru
      _
    // Predicated region
    $region30: #{conv_kxk_bn_stats.1} parent=1 // pred_check
      _
    $region31: #{conv_kxk_bn_stats.1} parent=1 // pred_check_branch
      %1542 = sbr.rel (0) target = $region33
    $region32: #{conv_kxk_bn_stats.1} parent=1 // pred_region
      %1544 = dma.done [#allocation4], 4096
    $region33: #{conv_kxk_bn_stats.1} parent=1 // pred_fallthru
      _
    // Predicated region
    $region34: #{conv_kxk_bn_stats.1} parent=1 // pred_check
      _
    $region35: #{conv_kxk_bn_stats.1} parent=1 // pred_check_branch
      %1546 = sbr.rel (0) target = $region37
    $region36: #{conv_kxk_bn_stats.1} parent=1 // pred_region
      _
    $region37: #{conv_kxk_bn_stats.1} parent=1 // pred_fallthru
      _
    // Predicated region
    $region38: #{conv_kxk_bn_stats.1} parent=1 // pred_check
      _
    $region39: #{conv_kxk_bn_stats.1} parent=1 // pred_check_branch
      %1548 = sbr.rel (0) target = $region41
    $region40: #{conv_kxk_bn_stats.1} parent=1 // pred_region
      _
    $region41: #{conv_kxk_bn_stats.1} parent=1 // pred_fallthru
      _
    %1549 = vsyncpa [#allocation4], 1

</llo_original>
